<compile_context>
chip_gen: v6e
topology: v6e:2x2x1
jax: 0.10.0
libtpu: 0.0.40
codegen_flags: <defaults>
</compile_context>

<pallas_src>
import functools

import jax
import jax.numpy as jnp
from jax.experimental import pallas as pl
from jax.experimental.pallas import tpu as pltpu


def _make_conv_block_kernel(H, W, cins, couts, compute_dtype):
    """Builds the fused kernel for one image per grid step."""
    num_layers = len(cins)

    def kernel(scale_ref, shift_ref, x_ref, *rest):
        w_refs = rest[:num_layers]          # each: (3, (W+2)*Cin_l, W*Cout_l)
        o_ref = rest[num_layers]            # (1, H, W*Cout)
        pad_ref = rest[num_layers + 1]      # (H+2, (W+2)*Cmax_in) scratch

        # --- BatchNorm (folded per-channel affine, pre-tiled over W) + ReLU, f32
        x = x_ref[0].astype(jnp.float32)                          # (H, W*Cin0)
        x = jnp.maximum(x * scale_ref[...] + shift_ref[...], 0.0)
        a = x.astype(compute_dtype)

        # Zero the padded scratch once (borders of every layer must be zero).
        pad_ref[...] = jnp.zeros_like(pad_ref)
        resident_cin = cins[0]

        # --- num_layers x (banded 3x3 conv + ReLU), all on the MXU.
        for l in range(num_layers):
            cin = cins[l]
            cout = couts[l]
            if cin != resident_cin:
                # Row width changed -> old interior may alias new border; re-zero.
                pad_ref[...] = jnp.zeros_like(pad_ref)
                resident_cin = cin

            # Write activation into the interior of the padded scratch:
            # rows 1..H, flattened columns [Cin, (W+1)*Cin).
            pad_ref[pl.ds(1, H), pl.ds(cin, W * cin)] = a

            row_in = (W + 2) * cin
            acc = jnp.zeros((H, W * cout), jnp.float32)
            for ky in range(3):
                # Row-shifted slab (static ref slice, no concatenates/copies).
                slab = pad_ref[pl.ds(ky, H), pl.ds(0, row_in)]    # (H, (W+2)*Cin)
                acc = acc + jnp.dot(slab, w_refs[l][ky],
                                    preferred_element_type=jnp.float32)
            a = jnp.maximum(acc, 0.0)                             # (H, W*Cout_l)
            if l + 1 < num_layers:
                a = a.astype(compute_dtype)

        # Lane-dense store: (H, W*Cout) with W*Cout = 128 here.
        o_ref[0] = a.astype(o_ref.dtype)

    return kernel


def _banded_weights(w_oihw, W, compute_dtype):
    """PyTorch (Cout, Cin, 3, 3) -> (3, (W+2)*Cin, W*Cout) block-banded matrices."""
    wt = jnp.transpose(w_oihw, (2, 3, 1, 0)).astype(jnp.float32)  # (3, 3, Cin, Cout)
    bands = []
    for ky in range(3):
        band = sum(
            jnp.kron(jnp.eye(W + 2, W, k=-kx, dtype=jnp.float32), wt[ky, kx])
            for kx in range(3))
        bands.append(band)
    return jnp.stack(bands, axis=0).astype(compute_dtype)


def conv_block2d_forward(x_nchw, gamma, beta, weights, eps=1e-5,
                         compute_dtype=jnp.float32):
    """Forward pass of ConvBlock2d (batch_norm=True, bias=False, dropout=None).

    x_nchw  : (N, Cin, H, W) float32
    gamma, beta : (Cin,) BatchNorm affine params
    weights : list of num_layers arrays, each (Cout_i, Cin_i, 3, 3) (PyTorch layout)
    compute_dtype : dtype fed to the MXU (f32 default; bf16 recommended on v6e/v7x,
                    accumulation is always f32).
    """
    N, Cin, H, W = x_nchw.shape
    num_layers = len(weights)

    x = jnp.transpose(x_nchw, (0, 2, 3, 1)).astype(jnp.float32)   # NHWC
    x_flat = x.reshape(N, H, W * Cin)                             # lane-dense input

    # Training-mode batch statistics (biased variance), single pass over x.
    cnt = N * H * W
    s1 = jnp.sum(x, axis=(0, 1, 2))
    s2 = jnp.sum(x * x, axis=(0, 1, 2))
    mean = s1 / cnt
    var = s2 / cnt - mean * mean
    scale = gamma / jnp.sqrt(var + eps)
    shift = beta - mean * scale
    # Pre-broadcast over W so the kernel applies BN on the (H, W*Cin) layout.
    scale_t = jnp.tile(scale, (W,)).reshape(1, W * Cin).astype(jnp.float32)
    shift_t = jnp.tile(shift, (W,)).reshape(1, W * Cin).astype(jnp.float32)

    # Per-layer channel sizes + banded weight slabs (built once, in the wrapper).
    cins = [w.shape[1] for w in weights]
    couts = [w.shape[0] for w in weights]
    wbs = [_banded_weights(w, W, compute_dtype) for w in weights]
    Cout = couts[-1]
    Cmax_in = max(cins)

    kernel = _make_conv_block_kernel(H, W, cins, couts, compute_dtype)

    grid_spec = pltpu.PrefetchScalarGridSpec(
        num_scalar_prefetch=0,
        grid=(N,),
        in_specs=[
            pl.BlockSpec((1, W * Cin), lambda n: (0, 0)),                 # scale
            pl.BlockSpec((1, W * Cin), lambda n: (0, 0)),                 # shift
            pl.BlockSpec((1, H, W * Cin), lambda n: (n, 0, 0)),           # x
            *[pl.BlockSpec(wb.shape, lambda n: (0, 0, 0)) for wb in wbs],  # weights
        ],
        out_specs=pl.BlockSpec((1, H, W * Cout), lambda n: (n, 0, 0)),
        scratch_shapes=[pltpu.VMEM((H + 2, (W + 2) * Cmax_in), compute_dtype)],
    )

    out = pl.pallas_call(
        kernel,
        out_shape=jax.ShapeDtypeStruct((N, H, W * Cout), jnp.float32),
        grid_spec=grid_spec,
        compiler_params=pltpu.CompilerParams(
            dimension_semantics=("parallel",),        # batch axis shards across TCs
            vmem_limit_bytes=32 * 1024 * 1024),
    )(scale_t, shift_t, x_flat, *wbs)

    out = out.reshape(N, H, W, Cout)
    return jnp.transpose(out, (0, 3, 1, 2))                        # back to NCHW


def _reference(x_nchw, gamma, beta, weights, eps=1e-5):
    """Pure-JAX reference (lax.conv) for a correctness check."""
    x = x_nchw.astype(jnp.float32)
    mean = jnp.mean(x, axis=(0, 2, 3), keepdims=True)
    var = jnp.mean((x - mean) ** 2, axis=(0, 2, 3), keepdims=True)
    x = (x - mean) / jnp.sqrt(var + eps)
    x = x * gamma.reshape(1, -1, 1, 1) + beta.reshape(1, -1, 1, 1)
    x = jnp.maximum(x, 0.0)
    for w in weights:
        x = jax.lax.conv_general_dilated(
            x, w, window_strides=(1, 1), padding="SAME",
            dimension_numbers=("NCHW", "OIHW", "NCHW"))
        x = jnp.maximum(x, 0.0)
    return x


if __name__ == "__main__":
    # Module config: input=4, internal=4 (default), output=8, num_layers=4,
    # batch_norm=True, bias=False, dropout=None.
    N, Cin, H, W = 2, 4, 16, 16
    Cint, Cout, num_layers = 4, 8, 4

    key = jax.random.PRNGKey(0)
    k_x, k_g, k_b, *k_w = jax.random.split(key, 3 + num_layers)

    x = jax.random.normal(k_x, (N, Cin, H, W), dtype=jnp.float32)
    gamma = 1.0 + 0.1 * jax.random.normal(k_g, (Cin,), dtype=jnp.float32)
    beta = 0.1 * jax.random.normal(k_b, (Cin,), dtype=jnp.float32)

    weights = []
    for i in range(num_layers):
        ci = Cin if i == 0 else Cint
        co = Cout if i == num_layers - 1 else Cint
        w = 0.1 * jax.random.normal(k_w[i], (co, ci, 3, 3), dtype=jnp.float32)
        weights.append(w)

    ref = _reference(x, gamma, beta, weights)

    # f32 path (default): bit-for-bit faithful to the module semantics.
    fwd_f32 = jax.jit(conv_block2d_forward)
    out_f32 = jax.block_until_ready(fwd_f32(x, gamma, beta, weights))
    assert out_f32.shape == (N, Cout, H, W)
    assert jnp.allclose(out_f32, ref, rtol=1e-3, atol=1e-3), "f32 kernel mismatch"

    # bf16 MXU-input path (recommended on v6e/v7x), f32 accumulation + f32 BN/ReLU.
    fwd_bf16 = jax.jit(functools.partial(conv_block2d_forward,
                                         compute_dtype=jnp.bfloat16))
    out_bf16 = jax.block_until_ready(fwd_bf16(x, gamma, beta, weights))
    assert out_bf16.shape == (N, Cout, H, W)
    assert jnp.allclose(out_bf16, ref, rtol=5e-2, atol=5e-2), "bf16 kernel mismatch"

    print("KERNEL_OK")
</pallas_src>

<mosaic_0001>
module attributes {stable_mosaic.version = 11 : i64} {
  func.func @kernel(%arg0: i32, %arg1: memref<1x64xf32, #tpu.memory_space<vmem>>, %arg2: memref<1x64xf32, #tpu.memory_space<vmem>>, %arg3: memref<1x16x64xf32, #tpu.memory_space<vmem>>, %arg4: memref<3x72x64xf32, #tpu.memory_space<vmem>>, %arg5: memref<3x72x64xf32, #tpu.memory_space<vmem>>, %arg6: memref<3x72x64xf32, #tpu.memory_space<vmem>>, %arg7: memref<3x72x128xf32, #tpu.memory_space<vmem>>, %arg8: memref<1x16x128xf32, #tpu.memory_space<vmem>>, %arg9: memref<18x72xf32, #tpu.memory_space<vmem>>) attributes {dimension_semantics = [#tpu.dimension_semantics<parallel>], iteration_bounds = array<i64: 2>, scalar_prefetch = 0 : i64, scratch_operands = 1 : i64, tpu.core_type = #tpu.core_type<tc>, window_params = [{pipeline_mode = #tpu.pipeline_mode<synchronous>, transform_indices = @transform_0, window_bounds = array<i64: 1, 64>}, {pipeline_mode = #tpu.pipeline_mode<synchronous>, transform_indices = @transform_1, window_bounds = array<i64: 1, 64>}, {transform_indices = @transform_2, window_bounds = array<i64: 1, 16, 64>}, {pipeline_mode = #tpu.pipeline_mode<synchronous>, transform_indices = @transform_3, window_bounds = array<i64: 3, 72, 64>}, {pipeline_mode = #tpu.pipeline_mode<synchronous>, transform_indices = @transform_4, window_bounds = array<i64: 3, 72, 64>}, {pipeline_mode = #tpu.pipeline_mode<synchronous>, transform_indices = @transform_5, window_bounds = array<i64: 3, 72, 64>}, {pipeline_mode = #tpu.pipeline_mode<synchronous>, transform_indices = @transform_6, window_bounds = array<i64: 3, 72, 128>}, {transform_indices = @transform_7, window_bounds = array<i64: 1, 16, 128>}]} {
    %c0 = arith.constant 0 : index
    %c0_0 = arith.constant 0 : index
    %c0_1 = arith.constant 0 : index
    %0 = vector.load %arg3[%c0, %c0_0, %c0_1] : memref<1x16x64xf32, #tpu.memory_space<vmem>>, vector<1x16x64xf32>
    %1 = vector.shape_cast %0 : vector<1x16x64xf32> to vector<16x64xf32>
    %c0_2 = arith.constant 0 : index
    %c0_3 = arith.constant 0 : index
    %2 = vector.load %arg1[%c0_2, %c0_3] : memref<1x64xf32, #tpu.memory_space<vmem>>, vector<1x64xf32>
    %3 = vector.broadcast %2 : vector<1x64xf32> to vector<16x64xf32>
    %4 = arith.mulf %1, %3 : vector<16x64xf32>
    %c0_4 = arith.constant 0 : index
    %c0_5 = arith.constant 0 : index
    %5 = vector.load %arg2[%c0_4, %c0_5] : memref<1x64xf32, #tpu.memory_space<vmem>>, vector<1x64xf32>
    %6 = vector.broadcast %5 : vector<1x64xf32> to vector<16x64xf32>
    %7 = arith.addf %4, %6 : vector<16x64xf32>
    %cst = arith.constant 0.000000e+00 : f32
    %8 = vector.broadcast %cst : f32 to vector<16x64xf32>
    %9 = arith.maximumf %7, %8 : vector<16x64xf32>
    %cst_6 = arith.constant 0.000000e+00 : f32
    %10 = vector.broadcast %cst_6 : f32 to vector<18x72xf32>
    %c0_7 = arith.constant 0 : index
    %c0_8 = arith.constant 0 : index
    %11 = vector.load %arg9[%c0_7, %c0_8] : memref<18x72xf32, #tpu.memory_space<vmem>>, vector<18x72xf32>
    tpu.vector_store %arg9[%c0_7, %c0_8], %10 {strides = array<i32>} : memref<18x72xf32, #tpu.memory_space<vmem>>, vector<18x72xf32>,
    %c1 = arith.constant 1 : index
    %c4 = arith.constant 4 : index
    %12 = vector.load %arg9[%c1, %c4] : memref<18x72xf32, #tpu.memory_space<vmem>>, vector<16x64xf32>
    tpu.vector_store %arg9[%c1, %c4], %9 {strides = array<i32>} : memref<18x72xf32, #tpu.memory_space<vmem>>, vector<16x64xf32>,
    %cst_9 = arith.constant 0.000000e+00 : f32
    %13 = vector.broadcast %cst_9 : f32 to vector<16x64xf32>
    %c0_10 = arith.constant 0 : index
    %c0_11 = arith.constant 0 : index
    %14 = vector.load %arg9[%c0_10, %c0_11] : memref<18x72xf32, #tpu.memory_space<vmem>>, vector<16x72xf32>
    %c0_12 = arith.constant 0 : index
    %c0_13 = arith.constant 0 : index
    %c0_14 = arith.constant 0 : index
    %15 = vector.load %arg4[%c0_12, %c0_13, %c0_14] : memref<3x72x64xf32, #tpu.memory_space<vmem>>, vector<1x72x64xf32>
    %16 = vector.shape_cast %15 : vector<1x72x64xf32> to vector<72x64xf32>
    %cst_15 = arith.constant dense<0.000000e+00> : vector<16x64xf32>
    %17 = tpu.matmul %14, %16, %cst_15 {dimension_numbers = #tpu.dot_dimension_numbers<[1], [0], [0], [1], [0, 0, 1, 1], [], []>} : vector<16x72xf32>, vector<72x64xf32>, vector<16x64xf32> -> vector<16x64xf32>
    %18 = arith.addf %13, %17 : vector<16x64xf32>
    %c1_16 = arith.constant 1 : index
    %c0_17 = arith.constant 0 : index
    %19 = vector.load %arg9[%c1_16, %c0_17] : memref<18x72xf32, #tpu.memory_space<vmem>>, vector<16x72xf32>
    %c1_18 = arith.constant 1 : index
    %c0_19 = arith.constant 0 : index
    %c0_20 = arith.constant 0 : index
    %20 = vector.load %arg4[%c1_18, %c0_19, %c0_20] : memref<3x72x64xf32, #tpu.memory_space<vmem>>, vector<1x72x64xf32>
    %21 = vector.shape_cast %20 : vector<1x72x64xf32> to vector<72x64xf32>
    %cst_21 = arith.constant dense<0.000000e+00> : vector<16x64xf32>
    %22 = tpu.matmul %19, %21, %cst_21 {dimension_numbers = #tpu.dot_dimension_numbers<[1], [0], [0], [1], [0, 0, 1, 1], [], []>} : vector<16x72xf32>, vector<72x64xf32>, vector<16x64xf32> -> vector<16x64xf32>
    %23 = arith.addf %18, %22 : vector<16x64xf32>
    %c2 = arith.constant 2 : index
    %c0_22 = arith.constant 0 : index
    %24 = vector.load %arg9[%c2, %c0_22] : memref<18x72xf32, #tpu.memory_space<vmem>>, vector<16x72xf32>
    %c2_23 = arith.constant 2 : index
    %c0_24 = arith.constant 0 : index
    %c0_25 = arith.constant 0 : index
    %25 = vector.load %arg4[%c2_23, %c0_24, %c0_25] : memref<3x72x64xf32, #tpu.memory_space<vmem>>, vector<1x72x64xf32>
    %26 = vector.shape_cast %25 : vector<1x72x64xf32> to vector<72x64xf32>
    %cst_26 = arith.constant dense<0.000000e+00> : vector<16x64xf32>
    %27 = tpu.matmul %24, %26, %cst_26 {dimension_numbers = #tpu.dot_dimension_numbers<[1], [0], [0], [1], [0, 0, 1, 1], [], []>} : vector<16x72xf32>, vector<72x64xf32>, vector<16x64xf32> -> vector<16x64xf32>
    %28 = arith.addf %23, %27 : vector<16x64xf32>
    %cst_27 = arith.constant 0.000000e+00 : f32
    %29 = vector.broadcast %cst_27 : f32 to vector<16x64xf32>
    %30 = arith.maximumf %28, %29 : vector<16x64xf32>
    %c1_28 = arith.constant 1 : index
    %c4_29 = arith.constant 4 : index
    %31 = vector.load %arg9[%c1_28, %c4_29] : memref<18x72xf32, #tpu.memory_space<vmem>>, vector<16x64xf32>
    tpu.vector_store %arg9[%c1_28, %c4_29], %30 {strides = array<i32>} : memref<18x72xf32, #tpu.memory_space<vmem>>, vector<16x64xf32>,
    %cst_30 = arith.constant 0.000000e+00 : f32
    %32 = vector.broadcast %cst_30 : f32 to vector<16x64xf32>
    %c0_31 = arith.constant 0 : index
    %c0_32 = arith.constant 0 : index
    %33 = vector.load %arg9[%c0_31, %c0_32] : memref<18x72xf32, #tpu.memory_space<vmem>>, vector<16x72xf32>
    %c0_33 = arith.constant 0 : index
    %c0_34 = arith.constant 0 : index
    %c0_35 = arith.constant 0 : index
    %34 = vector.load %arg5[%c0_33, %c0_34, %c0_35] : memref<3x72x64xf32, #tpu.memory_space<vmem>>, vector<1x72x64xf32>
    %35 = vector.shape_cast %34 : vector<1x72x64xf32> to vector<72x64xf32>
    %cst_36 = arith.constant dense<0.000000e+00> : vector<16x64xf32>
    %36 = tpu.matmul %33, %35, %cst_36 {dimension_numbers = #tpu.dot_dimension_numbers<[1], [0], [0], [1], [0, 0, 1, 1], [], []>} : vector<16x72xf32>, vector<72x64xf32>, vector<16x64xf32> -> vector<16x64xf32>
    %37 = arith.addf %32, %36 : vector<16x64xf32>
    %c1_37 = arith.constant 1 : index
    %c0_38 = arith.constant 0 : index
    %38 = vector.load %arg9[%c1_37, %c0_38] : memref<18x72xf32, #tpu.memory_space<vmem>>, vector<16x72xf32>
    %c1_39 = arith.constant 1 : index
    %c0_40 = arith.constant 0 : index
    %c0_41 = arith.constant 0 : index
    %39 = vector.load %arg5[%c1_39, %c0_40, %c0_41] : memref<3x72x64xf32, #tpu.memory_space<vmem>>, vector<1x72x64xf32>
    %40 = vector.shape_cast %39 : vector<1x72x64xf32> to vector<72x64xf32>
    %cst_42 = arith.constant dense<0.000000e+00> : vector<16x64xf32>
    %41 = tpu.matmul %38, %40, %cst_42 {dimension_numbers = #tpu.dot_dimension_numbers<[1], [0], [0], [1], [0, 0, 1, 1], [], []>} : vector<16x72xf32>, vector<72x64xf32>, vector<16x64xf32> -> vector<16x64xf32>
    %42 = arith.addf %37, %41 : vector<16x64xf32>
    %c2_43 = arith.constant 2 : index
    %c0_44 = arith.constant 0 : index
    %43 = vector.load %arg9[%c2_43, %c0_44] : memref<18x72xf32, #tpu.memory_space<vmem>>, vector<16x72xf32>
    %c2_45 = arith.constant 2 : index
    %c0_46 = arith.constant 0 : index
    %c0_47 = arith.constant 0 : index
    %44 = vector.load %arg5[%c2_45, %c0_46, %c0_47] : memref<3x72x64xf32, #tpu.memory_space<vmem>>, vector<1x72x64xf32>
    %45 = vector.shape_cast %44 : vector<1x72x64xf32> to vector<72x64xf32>
    %cst_48 = arith.constant dense<0.000000e+00> : vector<16x64xf32>
    %46 = tpu.matmul %43, %45, %cst_48 {dimension_numbers = #tpu.dot_dimension_numbers<[1], [0], [0], [1], [0, 0, 1, 1], [], []>} : vector<16x72xf32>, vector<72x64xf32>, vector<16x64xf32> -> vector<16x64xf32>
    %47 = arith.addf %42, %46 : vector<16x64xf32>
    %cst_49 = arith.constant 0.000000e+00 : f32
    %48 = vector.broadcast %cst_49 : f32 to vector<16x64xf32>
    %49 = arith.maximumf %47, %48 : vector<16x64xf32>
    %c1_50 = arith.constant 1 : index
    %c4_51 = arith.constant 4 : index
    %50 = vector.load %arg9[%c1_50, %c4_51] : memref<18x72xf32, #tpu.memory_space<vmem>>, vector<16x64xf32>
    tpu.vector_store %arg9[%c1_50, %c4_51], %49 {strides = array<i32>} : memref<18x72xf32, #tpu.memory_space<vmem>>, vector<16x64xf32>,
    %cst_52 = arith.constant 0.000000e+00 : f32
    %51 = vector.broadcast %cst_52 : f32 to vector<16x64xf32>
    %c0_53 = arith.constant 0 : index
    %c0_54 = arith.constant 0 : index
    %52 = vector.load %arg9[%c0_53, %c0_54] : memref<18x72xf32, #tpu.memory_space<vmem>>, vector<16x72xf32>
    %c0_55 = arith.constant 0 : index
    %c0_56 = arith.constant 0 : index
    %c0_57 = arith.constant 0 : index
    %53 = vector.load %arg6[%c0_55, %c0_56, %c0_57] : memref<3x72x64xf32, #tpu.memory_space<vmem>>, vector<1x72x64xf32>
    %54 = vector.shape_cast %53 : vector<1x72x64xf32> to vector<72x64xf32>
    %cst_58 = arith.constant dense<0.000000e+00> : vector<16x64xf32>
    %55 = tpu.matmul %52, %54, %cst_58 {dimension_numbers = #tpu.dot_dimension_numbers<[1], [0], [0], [1], [0, 0, 1, 1], [], []>} : vector<16x72xf32>, vector<72x64xf32>, vector<16x64xf32> -> vector<16x64xf32>
    %56 = arith.addf %51, %55 : vector<16x64xf32>
    %c1_59 = arith.constant 1 : index
    %c0_60 = arith.constant 0 : index
    %57 = vector.load %arg9[%c1_59, %c0_60] : memref<18x72xf32, #tpu.memory_space<vmem>>, vector<16x72xf32>
    %c1_61 = arith.constant 1 : index
    %c0_62 = arith.constant 0 : index
    %c0_63 = arith.constant 0 : index
    %58 = vector.load %arg6[%c1_61, %c0_62, %c0_63] : memref<3x72x64xf32, #tpu.memory_space<vmem>>, vector<1x72x64xf32>
    %59 = vector.shape_cast %58 : vector<1x72x64xf32> to vector<72x64xf32>
    %cst_64 = arith.constant dense<0.000000e+00> : vector<16x64xf32>
    %60 = tpu.matmul %57, %59, %cst_64 {dimension_numbers = #tpu.dot_dimension_numbers<[1], [0], [0], [1], [0, 0, 1, 1], [], []>} : vector<16x72xf32>, vector<72x64xf32>, vector<16x64xf32> -> vector<16x64xf32>
    %61 = arith.addf %56, %60 : vector<16x64xf32>
    %c2_65 = arith.constant 2 : index
    %c0_66 = arith.constant 0 : index
    %62 = vector.load %arg9[%c2_65, %c0_66] : memref<18x72xf32, #tpu.memory_space<vmem>>, vector<16x72xf32>
    %c2_67 = arith.constant 2 : index
    %c0_68 = arith.constant 0 : index
    %c0_69 = arith.constant 0 : index
    %63 = vector.load %arg6[%c2_67, %c0_68, %c0_69] : memref<3x72x64xf32, #tpu.memory_space<vmem>>, vector<1x72x64xf32>
    %64 = vector.shape_cast %63 : vector<1x72x64xf32> to vector<72x64xf32>
    %cst_70 = arith.constant dense<0.000000e+00> : vector<16x64xf32>
    %65 = tpu.matmul %62, %64, %cst_70 {dimension_numbers = #tpu.dot_dimension_numbers<[1], [0], [0], [1], [0, 0, 1, 1], [], []>} : vector<16x72xf32>, vector<72x64xf32>, vector<16x64xf32> -> vector<16x64xf32>
    %66 = arith.addf %61, %65 : vector<16x64xf32>
    %cst_71 = arith.constant 0.000000e+00 : f32
    %67 = vector.broadcast %cst_71 : f32 to vector<16x64xf32>
    %68 = arith.maximumf %66, %67 : vector<16x64xf32>
    %c1_72 = arith.constant 1 : index
    %c4_73 = arith.constant 4 : index
    %69 = vector.load %arg9[%c1_72, %c4_73] : memref<18x72xf32, #tpu.memory_space<vmem>>, vector<16x64xf32>
    tpu.vector_store %arg9[%c1_72, %c4_73], %68 {strides = array<i32>} : memref<18x72xf32, #tpu.memory_space<vmem>>, vector<16x64xf32>,
    %cst_74 = arith.constant 0.000000e+00 : f32
    %70 = vector.broadcast %cst_74 : f32 to vector<16x128xf32>
    %c0_75 = arith.constant 0 : index
    %c0_76 = arith.constant 0 : index
    %71 = vector.load %arg9[%c0_75, %c0_76] : memref<18x72xf32, #tpu.memory_space<vmem>>, vector<16x72xf32>
    %c0_77 = arith.constant 0 : index
    %c0_78 = arith.constant 0 : index
    %c0_79 = arith.constant 0 : index
    %72 = vector.load %arg7[%c0_77, %c0_78, %c0_79] : memref<3x72x128xf32, #tpu.memory_space<vmem>>, vector<1x72x128xf32>
    %73 = vector.shape_cast %72 : vector<1x72x128xf32> to vector<72x128xf32>
    %cst_80 = arith.constant dense<0.000000e+00> : vector<16x128xf32>
    %74 = tpu.matmul %71, %73, %cst_80 {dimension_numbers = #tpu.dot_dimension_numbers<[1], [0], [0], [1], [0, 0, 1, 1], [], []>} : vector<16x72xf32>, vector<72x128xf32>, vector<16x128xf32> -> vector<16x128xf32>
    %75 = arith.addf %70, %74 : vector<16x128xf32>
    %c1_81 = arith.constant 1 : index
    %c0_82 = arith.constant 0 : index
    %76 = vector.load %arg9[%c1_81, %c0_82] : memref<18x72xf32, #tpu.memory_space<vmem>>, vector<16x72xf32>
    %c1_83 = arith.constant 1 : index
    %c0_84 = arith.constant 0 : index
    %c0_85 = arith.constant 0 : index
    %77 = vector.load %arg7[%c1_83, %c0_84, %c0_85] : memref<3x72x128xf32, #tpu.memory_space<vmem>>, vector<1x72x128xf32>
    %78 = vector.shape_cast %77 : vector<1x72x128xf32> to vector<72x128xf32>
    %cst_86 = arith.constant dense<0.000000e+00> : vector<16x128xf32>
    %79 = tpu.matmul %76, %78, %cst_86 {dimension_numbers = #tpu.dot_dimension_numbers<[1], [0], [0], [1], [0, 0, 1, 1], [], []>} : vector<16x72xf32>, vector<72x128xf32>, vector<16x128xf32> -> vector<16x128xf32>
    %80 = arith.addf %75, %79 : vector<16x128xf32>
    %c2_87 = arith.constant 2 : index
    %c0_88 = arith.constant 0 : index
    %81 = vector.load %arg9[%c2_87, %c0_88] : memref<18x72xf32, #tpu.memory_space<vmem>>, vector<16x72xf32>
    %c2_89 = arith.constant 2 : index
    %c0_90 = arith.constant 0 : index
    %c0_91 = arith.constant 0 : index
    %82 = vector.load %arg7[%c2_89, %c0_90, %c0_91] : memref<3x72x128xf32, #tpu.memory_space<vmem>>, vector<1x72x128xf32>
    %83 = vector.shape_cast %82 : vector<1x72x128xf32> to vector<72x128xf32>
    %cst_92 = arith.constant dense<0.000000e+00> : vector<16x128xf32>
    %84 = tpu.matmul %81, %83, %cst_92 {dimension_numbers = #tpu.dot_dimension_numbers<[1], [0], [0], [1], [0, 0, 1, 1], [], []>} : vector<16x72xf32>, vector<72x128xf32>, vector<16x128xf32> -> vector<16x128xf32>
    %85 = arith.addf %80, %84 : vector<16x128xf32>
    %cst_93 = arith.constant 0.000000e+00 : f32
    %86 = vector.broadcast %cst_93 : f32 to vector<16x128xf32>
    %87 = arith.maximumf %85, %86 : vector<16x128xf32>
    %c0_94 = arith.constant 0 : index
    %c0_95 = arith.constant 0 : index
    %c0_96 = arith.constant 0 : index
    %88 = vector.load %arg8[%c0_94, %c0_95, %c0_96] : memref<1x16x128xf32, #tpu.memory_space<vmem>>, vector<1x16x128xf32>
    %89 = vector.shape_cast %88 : vector<1x16x128xf32> to vector<16x128xf32>
    %90 = vector.shape_cast %87 : vector<16x128xf32> to vector<1x16x128xf32>
    tpu.vector_store %arg8[%c0_94, %c0_95, %c0_96], %90 {strides = array<i32>} : memref<1x16x128xf32, #tpu.memory_space<vmem>>, vector<1x16x128xf32>,
    return
  }
  func.func @transform_0(%arg0: i32) -> (i32, i32) {
    %c0_i32 = arith.constant 0 : i32
    %c0_i32_0 = arith.constant 0 : i32
    %c0_i32_1 = arith.constant 0 : i32
    return %c0_i32, %c0_i32_0 : i32, i32
  }
  func.func @transform_1(%arg0: i32) -> (i32, i32) {
    %c0_i32 = arith.constant 0 : i32
    %c0_i32_0 = arith.constant 0 : i32
    %c0_i32_1 = arith.constant 0 : i32
    return %c0_i32, %c0_i32_0 : i32, i32
  }
  func.func @transform_2(%arg0: i32) -> (i32, i32, i32) {
    %c0_i32 = arith.constant 0 : i32
    %c0_i32_0 = arith.constant 0 : i32
    %c0_i32_1 = arith.constant 0 : i32
    return %arg0, %c0_i32, %c0_i32_0 : i32, i32, i32
  }
  func.func @transform_3(%arg0: i32) -> (i32, i32, i32) {
    %c0_i32 = arith.constant 0 : i32
    %c0_i32_0 = arith.constant 0 : i32
    %c0_i32_1 = arith.constant 0 : i32
    %c0_i32_2 = arith.constant 0 : i32
    return %c0_i32, %c0_i32_0, %c0_i32_1 : i32, i32, i32
  }
  func.func @transform_4(%arg0: i32) -> (i32, i32, i32) {
    %c0_i32 = arith.constant 0 : i32
    %c0_i32_0 = arith.constant 0 : i32
    %c0_i32_1 = arith.constant 0 : i32
    %c0_i32_2 = arith.constant 0 : i32
    return %c0_i32, %c0_i32_0, %c0_i32_1 : i32, i32, i32
  }
  func.func @transform_5(%arg0: i32) -> (i32, i32, i32) {
    %c0_i32 = arith.constant 0 : i32
    %c0_i32_0 = arith.constant 0 : i32
    %c0_i32_1 = arith.constant 0 : i32
    %c0_i32_2 = arith.constant 0 : i32
    return %c0_i32, %c0_i32_0, %c0_i32_1 : i32, i32, i32
  }
  func.func @transform_6(%arg0: i32) -> (i32, i32, i32) {
    %c0_i32 = arith.constant 0 : i32
    %c0_i32_0 = arith.constant 0 : i32
    %c0_i32_1 = arith.constant 0 : i32
    %c0_i32_2 = arith.constant 0 : i32
    return %c0_i32, %c0_i32_0, %c0_i32_1 : i32, i32, i32
  }
  func.func @transform_7(%arg0: i32) -> (i32, i32, i32) {
    %c0_i32 = arith.constant 0 : i32
    %c0_i32_0 = arith.constant 0 : i32
    %c0_i32_1 = arith.constant 0 : i32
    return %arg0, %c0_i32, %c0_i32_0 : i32, i32, i32
  }
}

</mosaic_0001>

<llo_original>
// kernel: tile.18
$region0: #{tile.18}
  #allocation0 [shape = 's32[1]{0}', space=sflag, size = 0x4, scoped, tag = 'scoped memory for tile.18']
  %s0 = inlined_call_operand.vmem [shape: f32[4], index: 0, kind: input, shape index: {}]
  %s1 = inlined_call_operand.vmem [shape: f32[16,4], index: 1, kind: output, shape index: {}]
  // Predicated region
  $region2: #{tile.18} parent=0 // pred_check
    _
  $region3: #{tile.18} parent=0 // pred_check_branch
    %3 = sbr.rel (0) target = $region5
  $region4: #{tile.18} parent=0 // pred_region
    _
  $region5: #{tile.18} parent=0 // pred_fallthru
    _
  %v4 = vld [vmem:[%s0] ss:$0 sm:$0xff]
  %5 = vst [vmem:[%s1] sm:$0xff] %v4
  %s6 = scalar_lea.vmem %s1, 8
  %7 = vst [vmem:[%s6] sm:$0xff] %v4

// kernel: tile.19
$region0: #{tile.19}
  %s0 = inlined_call_operand.vmem [shape: f32[16,4], index: 0, kind: input, shape index: {}]
  %s1 = inlined_call_operand.vmem [shape: f32[1,64], index: 1, kind: output, shape index: {}]
  $region1: #{tile.19} parent=0
    #allocation0 [shape = 'u8[4096]{0}', space=vmem, size = 0x1000, scoped, tag = 'scoped mem for output reshape']
    %v2 = vld [vmem:[%s0] sm:$0x1]
    %vm3 = vcmask 31744
    %4 = vst.msk [vmem:[#allocation0] sm:$0x1] %vm3, %v2
    %s5 = scalar_lea.vmem %s0, 15
    %v6 = vld [vmem:[%s5] sm:$0x1]
    %7 = vrot.lane.b32.xlu0 %v6, 60
    %v8 = vpop.permute.xlu0 %7
    %vm9 = vcmask 523744
    %10 = vst.msk [vmem:[#allocation0] sm:$0x1] %vm9, %v8
    %s11 = scalar_lea.vmem %s0, 14
    %v12 = vld [vmem:[%s11] sm:$0x1]
    %13 = vrot.lane.b32.xlu0 %v12, 56
    %v14 = vpop.permute.xlu0 %13
    %vm15 = vcmask 490944
    %16 = vst.msk [vmem:[#allocation0] sm:$0x1] %vm15, %v14
    %s17 = scalar_lea.vmem %s0, 13
    %v18 = vld [vmem:[%s17] sm:$0x1]
    %19 = vrot.lane.b32.xlu0 %v18, 52
    %v20 = vpop.permute.xlu0 %19
    %vm21 = vcmask 458144
    %22 = vst.msk [vmem:[#allocation0] sm:$0x1] %vm21, %v20
    %s23 = scalar_lea.vmem %s0, 12
    %v24 = vld [vmem:[%s23] sm:$0x1]
    %25 = vrot.lane.b32.xlu0 %v24, 48
    %v26 = vpop.permute.xlu0 %25
    %vm27 = vcmask 425344
    %28 = vst.msk [vmem:[#allocation0] sm:$0x1] %vm27, %v26
    %s29 = scalar_lea.vmem %s0, 11
    %v30 = vld [vmem:[%s29] sm:$0x1]
    %31 = vrot.lane.b32.xlu0 %v30, 44
    %v32 = vpop.permute.xlu0 %31
    %vm33 = vcmask 392544
    %34 = vst.msk [vmem:[#allocation0] sm:$0x1] %vm33, %v32
    %s35 = scalar_lea.vmem %s0, 10
    %v36 = vld [vmem:[%s35] sm:$0x1]
    %37 = vrot.lane.b32.xlu0 %v36, 40
    %v38 = vpop.permute.xlu0 %37
    %vm39 = vcmask 359744
    %40 = vst.msk [vmem:[#allocation0] sm:$0x1] %vm39, %v38
    %s41 = scalar_lea.vmem %s0, 9
    %v42 = vld [vmem:[%s41] sm:$0x1]
    %43 = vrot.lane.b32.xlu0 %v42, 36
    %v44 = vpop.permute.xlu0 %43
    %vm45 = vcmask 326944
    %46 = vst.msk [vmem:[#allocation0] sm:$0x1] %vm45, %v44
    %s47 = scalar_lea.vmem %s0, 8
    %v48 = vld [vmem:[%s47] sm:$0x1]
    %49 = vrot.lane.b32.xlu0 %v48, 32
    %v50 = vpop.permute.xlu0 %49
    %vm51 = vcmask 294144
    %52 = vst.msk [vmem:[#allocation0] sm:$0x1] %vm51, %v50
    %s53 = scalar_lea.vmem %s0, 7
    %v54 = vld [vmem:[%s53] sm:$0x1]
    %55 = vrot.lane.b32.xlu0 %v54, 28
    %v56 = vpop.permute.xlu0 %55
    %vm57 = vcmask 261344
    %58 = vst.msk [vmem:[#allocation0] sm:$0x1] %vm57, %v56
    %s59 = scalar_lea.vmem %s0, 6
    %v60 = vld [vmem:[%s59] sm:$0x1]
    %61 = vrot.lane.b32.xlu0 %v60, 24
    %v62 = vpop.permute.xlu0 %61
    %vm63 = vcmask 228544
    %64 = vst.msk [vmem:[#allocation0] sm:$0x1] %vm63, %v62
    %s65 = scalar_lea.vmem %s0, 5
    %v66 = vld [vmem:[%s65] sm:$0x1]
    %67 = vrot.lane.b32.xlu0 %v66, 20
    %v68 = vpop.permute.xlu0 %67
    %vm69 = vcmask 195744
    %70 = vst.msk [vmem:[#allocation0] sm:$0x1] %vm69, %v68
    %s71 = scalar_lea.vmem %s0, 4
    %v72 = vld [vmem:[%s71] sm:$0x1]
    %73 = vrot.lane.b32.xlu0 %v72, 16
    %v74 = vpop.permute.xlu0 %73
    %vm75 = vcmask 162944
    %76 = vst.msk [vmem:[#allocation0] sm:$0x1] %vm75, %v74
    %s77 = scalar_lea.vmem %s0, 3
    %v78 = vld [vmem:[%s77] sm:$0x1]
    %79 = vrot.lane.b32.xlu0 %v78, 12
    %v80 = vpop.permute.xlu0 %79
    %vm81 = vcmask 130144
    %82 = vst.msk [vmem:[#allocation0] sm:$0x1] %vm81, %v80
    %s83 = scalar_lea.vmem %s0, 2
    %v84 = vld [vmem:[%s83] sm:$0x1]
    %85 = vrot.lane.b32.xlu0 %v84, 8
    %v86 = vpop.permute.xlu0 %85
    %vm87 = vcmask 97344
    %88 = vst.msk [vmem:[#allocation0] sm:$0x1] %vm87, %v86
    %s89 = scalar_lea.vmem %s0, 1
    %v90 = vld [vmem:[%s89] sm:$0x1]
    %91 = vrot.lane.b32.xlu0 %v90, 4
    %v92 = vpop.permute.xlu0 %91
    %vm93 = vcmask 64544
    %94 = vst.msk [vmem:[#allocation0] sm:$0x1] %vm93, %v92
    %s96 = sshll.u32 1, 1
    %s97 = ssub.s32 %s96, 1
    %v99 = vld [vmem:[#allocation0] sm:%s97]
    %s100 = sshll.u32 1, 1
    %s101 = ssub.s32 %s100, 1
    %102 = vst [vmem:[%s1] sm:%s101] %v99

// kernel: conv_block2d_forward.1
$region0: #{conv_block2d_forward.1}
  #allocation0 [shape = 'u32[]', space=smem, size = 0x4, offset = 0x4, fixed_abs, tag = 'smem constant byte address 0x4 - core index']
  #allocation1 [shape = 'u32[144,128]{1,0:T(1,128)}', space=vmem, size = 0x12000, scoped, tag = 'internal scratch']
  #allocation2 [shape = 'f32[18,72]{1,0:T(8,128)}', space=vmem, size = 0x3000, scoped, tag = 'scratch operand']
  %s0 = inlined_call_operand.vmem [shape: f32[1,64], index: 0, kind: input, shape index: {}]
  %s1 = inlined_call_operand.vmem [shape: f32[1,64], index: 1, kind: input, shape index: {}]
  %s2 = inlined_call_operand.vmem [shape: f32[2,16,64], index: 2, kind: input, shape index: {}]
  %s3 = inlined_call_operand.vmem [shape: f32[3,72,64], index: 3, kind: input, shape index: {}]
  %s4 = inlined_call_operand.vmem [shape: f32[3,72,64], index: 4, kind: input, shape index: {}]
  %s5 = inlined_call_operand.vmem [shape: f32[3,72,64], index: 5, kind: input, shape index: {}]
  %s6 = inlined_call_operand.vmem [shape: f32[3,72,128], index: 6, kind: input, shape index: {}]
  %s7 = inlined_call_operand.vmem [shape: f32[2,16,128], index: 7, kind: output, shape index: {}]
  %s8 = sld [smem:[#allocation0]]
  $region61: #{conv_block2d_forward.1} parent=0
    _
  %s10 = ssub.s32 1, %s8
  %s11 = scalar_select 0, %s10, %s8
  loop: start=0, step=1, limit=4
  $region2: #{conv_block2d_forward.1} parent=0 // loop_pre_header
    _
  $region3: #{conv_block2d_forward.1} parent=0 // loop_header
    %s13 = sphi 0, %s17
    %p14 = scmp.ge.s32.totalorder %s13, 4
    %s21 = sphi 0, %s21
    %s23 = sphi 0, %s21
    %s24 = sphi 0, %s23
    %s38 = sphi 0, %s24
    %s42 = sphi 0, %s42
    %s44 = sphi 0, %s42
    %s45 = sphi 0, %s44
    %s59 = sphi 0, %s45
    %s65 = sphi 0, %s67
    %s68 = sphi 0, %s65
    %s69 = sphi 0, %s68
    %s85 = sphi 0, %s69
    %s89 = sphi 0, %s89
    %s91 = sphi 0, %s89
    %s92 = sphi 0, %s91
    %s106 = sphi 0, %s92
    %s110 = sphi 0, %s110
    %s112 = sphi 0, %s110
    %s113 = sphi 0, %s112
    %s127 = sphi 0, %s113
    %s131 = sphi 0, %s131
    %s133 = sphi 0, %s131
    %s134 = sphi 0, %s133
    %s148 = sphi 0, %s134
    %s152 = sphi 0, %s152
    %s154 = sphi 0, %s152
    %s155 = sphi 0, %s154
    %s169 = sphi 0, %s155
    %s175 = sphi 0, %s177
    %s178 = sphi 0, %s175
    %s179 = sphi 0, %s178
    %s195 = sphi 0, %s179
  $region4: #{conv_block2d_forward.1} parent=0 // loop_header_branch
    %16 = sbr.rel (%p14) target = $region8
  $region5: #{conv_block2d_forward.1} parent=0 // loop_body
    %s18 = ssub.s32 %s13, 1
    %s19 = ssub.s32 %s13, 2
    %s20 = sadd.s32 %s13, 1
    %s22 = sadd.s32 %s21, 1
    %p25 = scmp.eq.s32.totalorder %s13, 1
    %p26 = scmp.ne.s32.totalorder %s21, %s23
    %p27 = scmp.eq.s32.totalorder %s13, 0
    %p28 = por %p26, %p27
    %p29 = scmp.ne.s32.totalorder %s21, %s23
    %p30 = scmp.eq.s32.totalorder %s18, 1
    %p31 = por %p29, %p30
    %p32 = scmp.ne.s32.totalorder %s23, %s24
    %p33 = scmp.eq.s32.totalorder %s18, 0
    %p34 = por %p32, %p33
    %p35 = scmp.ne.s32.totalorder %s23, %s24
    %p36 = scmp.eq.s32.totalorder %s19, 1
    %p37 = por %p35, %p36
    %p39 = scmp.ne.s32.totalorder %s24, %s38
    %p40 = scmp.eq.s32.totalorder %s19, 0
    %p41 = por %p39, %p40
    %s43 = sadd.s32 %s42, 1
    %p46 = scmp.eq.s32.totalorder %s13, 1
    %p47 = scmp.ne.s32.totalorder %s42, %s44
    %p48 = scmp.eq.s32.totalorder %s13, 0
    %p49 = por %p47, %p48
    %p50 = scmp.ne.s32.totalorder %s42, %s44
    %p51 = scmp.eq.s32.totalorder %s18, 1
    %p52 = por %p50, %p51
    %p53 = scmp.ne.s32.totalorder %s44, %s45
    %p54 = scmp.eq.s32.totalorder %s18, 0
    %p55 = por %p53, %p54
    %p56 = scmp.ne.s32.totalorder %s44, %s45
    %p57 = scmp.eq.s32.totalorder %s19, 1
    %p58 = por %p56, %p57
    %p60 = scmp.ne.s32.totalorder %s45, %s59
    %p61 = scmp.eq.s32.totalorder %s19, 0
    %p62 = por %p60, %p61
    %s63 = ssub.s32 %s13, %s20
    %p64 = scmp.eq.s32.totalorder %s63, 0
    %s66 = sadd.s32 %s65, 1
    %s67 = scalar_select %p64, %s65, %s66
    %p70 = pneg %p64
    %p71 = scmp.eq.s32.totalorder %s13, 1
    %p72 = por %p70, %p71
    %p73 = scmp.ne.s32.totalorder %s65, %s68
    %p74 = scmp.eq.s32.totalorder %s13, 0
    %p75 = por %p73, %p74
    %p76 = scmp.ne.s32.totalorder %s65, %s68
    %p77 = scmp.eq.s32.totalorder %s18, 1
    %p78 = por %p76, %p77
    %p79 = scmp.ne.s32.totalorder %s68, %s69
    %p80 = scmp.eq.s32.totalorder %s18, 0
    %p81 = por %p79, %p80
    %p82 = scmp.ne.s32.totalorder %s68, %s69
    %p83 = scmp.eq.s32.totalorder %s19, 1
    %p84 = por %p82, %p83
    %p86 = scmp.ne.s32.totalorder %s69, %s85
    %p87 = scmp.eq.s32.totalorder %s19, 0
    %p88 = por %p86, %p87
    %s90 = sadd.s32 %s89, 1
    %p93 = scmp.eq.s32.totalorder %s13, 1
    %p94 = scmp.ne.s32.totalorder %s89, %s91
    %p95 = scmp.eq.s32.totalorder %s13, 0
    %p96 = por %p94, %p95
    %p97 = scmp.ne.s32.totalorder %s89, %s91
    %p98 = scmp.eq.s32.totalorder %s18, 1
    %p99 = por %p97, %p98
    %p100 = scmp.ne.s32.totalorder %s91, %s92
    %p101 = scmp.eq.s32.totalorder %s18, 0
    %p102 = por %p100, %p101
    %p103 = scmp.ne.s32.totalorder %s91, %s92
    %p104 = scmp.eq.s32.totalorder %s19, 1
    %p105 = por %p103, %p104
    %p107 = scmp.ne.s32.totalorder %s92, %s106
    %p108 = scmp.eq.s32.totalorder %s19, 0
    %p109 = por %p107, %p108
    %s111 = sadd.s32 %s110, 1
    %p114 = scmp.eq.s32.totalorder %s13, 1
    %p115 = scmp.ne.s32.totalorder %s110, %s112
    %p116 = scmp.eq.s32.totalorder %s13, 0
    %p117 = por %p115, %p116
    %p118 = scmp.ne.s32.totalorder %s110, %s112
    %p119 = scmp.eq.s32.totalorder %s18, 1
    %p120 = por %p118, %p119
    %p121 = scmp.ne.s32.totalorder %s112, %s113
    %p122 = scmp.eq.s32.totalorder %s18, 0
    %p123 = por %p121, %p122
    %p124 = scmp.ne.s32.totalorder %s112, %s113
    %p125 = scmp.eq.s32.totalorder %s19, 1
    %p126 = por %p124, %p125
    %p128 = scmp.ne.s32.totalorder %s113, %s127
    %p129 = scmp.eq.s32.totalorder %s19, 0
    %p130 = por %p128, %p129
    %s132 = sadd.s32 %s131, 1
    %p135 = scmp.eq.s32.totalorder %s13, 1
    %p136 = scmp.ne.s32.totalorder %s131, %s133
    %p137 = scmp.eq.s32.totalorder %s13, 0
    %p138 = por %p136, %p137
    %p139 = scmp.ne.s32.totalorder %s131, %s133
    %p140 = scmp.eq.s32.totalorder %s18, 1
    %p141 = por %p139, %p140
    %p142 = scmp.ne.s32.totalorder %s133, %s134
    %p143 = scmp.eq.s32.totalorder %s18, 0
    %p144 = por %p142, %p143
    %p145 = scmp.ne.s32.totalorder %s133, %s134
    %p146 = scmp.eq.s32.totalorder %s19, 1
    %p147 = por %p145, %p146
    %p149 = scmp.ne.s32.totalorder %s134, %s148
    %p150 = scmp.eq.s32.totalorder %s19, 0
    %p151 = por %p149, %p150
    %s153 = sadd.s32 %s152, 1
    %p156 = scmp.eq.s32.totalorder %s13, 1
    %p157 = scmp.ne.s32.totalorder %s152, %s154
    %p158 = scmp.eq.s32.totalorder %s13, 0
    %p159 = por %p157, %p158
    %p160 = scmp.ne.s32.totalorder %s152, %s154
    %p161 = scmp.eq.s32.totalorder %s18, 1
    %p162 = por %p160, %p161
    %p163 = scmp.ne.s32.totalorder %s154, %s155
    %p164 = scmp.eq.s32.totalorder %s18, 0
    %p165 = por %p163, %p164
    %p166 = scmp.ne.s32.totalorder %s154, %s155
    %p167 = scmp.eq.s32.totalorder %s19, 1
    %p168 = por %p166, %p167
    %p170 = scmp.ne.s32.totalorder %s155, %s169
    %p171 = scmp.eq.s32.totalorder %s19, 0
    %p172 = por %p170, %p171
    %s173 = ssub.s32 %s13, %s20
    %p174 = scmp.eq.s32.totalorder %s173, 0
    %s176 = sadd.s32 %s175, 1
    %s177 = scalar_select %p174, %s175, %s176
    %p180 = pneg %p174
    %p181 = scmp.eq.s32.totalorder %s13, 1
    %p182 = por %p180, %p181
    %p183 = scmp.ne.s32.totalorder %s175, %s178
    %p184 = scmp.eq.s32.totalorder %s13, 0
    %p185 = por %p183, %p184
    %p186 = scmp.ne.s32.totalorder %s175, %s178
    %p187 = scmp.eq.s32.totalorder %s18, 1
    %p188 = por %p186, %p187
    %p189 = scmp.ne.s32.totalorder %s178, %s179
    %p190 = scmp.eq.s32.totalorder %s18, 0
    %p191 = por %p189, %p190
    %p192 = scmp.ne.s32.totalorder %s178, %s179
    %p193 = scmp.eq.s32.totalorder %s19, 1
    %p194 = por %p192, %p193
    %p196 = scmp.ne.s32.totalorder %s179, %s195
    %p197 = scmp.eq.s32.totalorder %s19, 0
    %p198 = por %p196, %p197
    %p199 = scmp.le.s32.totalorder 1, %s13
    %p200 = scmp.lt.s32.totalorder %s13, 3
    %p201 = pnand %p199, %p200
    %p202 = pneg %p201
    // Predicated region
    $region9: #{conv_block2d_forward.1} parent=5 // pred_check
      _
    $region10: #{conv_block2d_forward.1} parent=5 // pred_check_branch
      %204 = sbr.rel (%p201) target = $region12
    $region11: #{conv_block2d_forward.1} parent=5 // pred_region
      %s205 = ssub.s32 %s13, 1
      // Predicated region
      $region13: #{conv_block2d_forward.1} parent=11 // pred_check
        %p206 = pneg %p34
      $region14: #{conv_block2d_forward.1} parent=11 // pred_check_branch
        %208 = sbr.rel (%p206) target = $region16
      $region15: #{conv_block2d_forward.1} parent=11 // pred_region
        _
      $region16: #{conv_block2d_forward.1} parent=11 // pred_fallthru
        _
      // Predicated region
      $region17: #{conv_block2d_forward.1} parent=11 // pred_check
        %p209 = pneg %p55
      $region18: #{conv_block2d_forward.1} parent=11 // pred_check_branch
        %211 = sbr.rel (%p209) target = $region20
      $region19: #{conv_block2d_forward.1} parent=11 // pred_region
        _
      $region20: #{conv_block2d_forward.1} parent=11 // pred_fallthru
        _
      // Predicated region
      $region21: #{conv_block2d_forward.1} parent=11 // pred_check
        %p212 = pneg %p102
      $region22: #{conv_block2d_forward.1} parent=11 // pred_check_branch
        %214 = sbr.rel (%p212) target = $region24
      $region23: #{conv_block2d_forward.1} parent=11 // pred_region
        _
      $region24: #{conv_block2d_forward.1} parent=11 // pred_fallthru
        _
      // Predicated region
      $region25: #{conv_block2d_forward.1} parent=11 // pred_check
        %p215 = pneg %p123
      $region26: #{conv_block2d_forward.1} parent=11 // pred_check_branch
        %217 = sbr.rel (%p215) target = $region28
      $region27: #{conv_block2d_forward.1} parent=11 // pred_region
        _
      $region28: #{conv_block2d_forward.1} parent=11 // pred_fallthru
        _
      // Predicated region
      $region29: #{conv_block2d_forward.1} parent=11 // pred_check
        %p218 = pneg %p144
      $region30: #{conv_block2d_forward.1} parent=11 // pred_check_branch
        %220 = sbr.rel (%p218) target = $region32
      $region31: #{conv_block2d_forward.1} parent=11 // pred_region
        _
      $region32: #{conv_block2d_forward.1} parent=11 // pred_fallthru
        _
      // Predicated region
      $region33: #{conv_block2d_forward.1} parent=11 // pred_check
        %p221 = pneg %p165
      $region34: #{conv_block2d_forward.1} parent=11 // pred_check_branch
        %223 = sbr.rel (%p221) target = $region36
      $region35: #{conv_block2d_forward.1} parent=11 // pred_region
        _
      $region36: #{conv_block2d_forward.1} parent=11 // pred_fallthru
        _
    $region12: #{conv_block2d_forward.1} parent=5 // pred_fallthru
      _
    %p224 = scmp.lt.s32.totalorder %s13, 2
    // Predicated region
    $region37: #{conv_block2d_forward.1} parent=5 // pred_check
      %p225 = pneg %p224
    $region38: #{conv_block2d_forward.1} parent=5 // pred_check_branch
      %227 = sbr.rel (%p225) target = $region40
    $region39: #{conv_block2d_forward.1} parent=5 // pred_region
      // Predicated region
      $region41: #{conv_block2d_forward.1} parent=39 // pred_check
        %p228 = pneg %p75
      $region42: #{conv_block2d_forward.1} parent=39 // pred_check_branch
        %230 = sbr.rel (%p228) target = $region44
      $region43: #{conv_block2d_forward.1} parent=39 // pred_region
        %p231 = scmp.lt.s32.totalorder %s13, 1
        %s232 = scalar_select %p231, %s13, 1
        %s233 = smul.addr %s232, 2
        %s234 = smul.addr %s233, 8
        %s235 = scalar_lea.vmem %s2, %s234
      $region44: #{conv_block2d_forward.1} parent=39 // pred_fallthru
        _
    $region40: #{conv_block2d_forward.1} parent=5 // pred_fallthru
      _
    %p236 = scmp.le.s32.totalorder 1, %s13
    %p237 = scmp.lt.s32.totalorder %s13, 3
    %p238 = pnand %p236, %p237
    %p239 = pneg %p238
    // Predicated region
    $region45: #{conv_block2d_forward.1} parent=5 // pred_check
      _
    $region46: #{conv_block2d_forward.1} parent=5 // pred_check_branch
      %241 = sbr.rel (%p238) target = $region48
    $region47: #{conv_block2d_forward.1} parent=5 // pred_region
      %s242 = ssub.s32 %s13, 1
      %p243 = pneg %p34
      %p244 = pneg %p31
      %p245 = pneg %p55
      %p246 = pneg %p52
      %p247 = scmp.lt.s32.totalorder %s18, 1
      %s248 = scalar_select %p247, %s18, 1
      %s249 = smul.addr %s248, 2
      %s250 = smul.addr %s249, 8
      %s251 = scalar_lea.vmem %s2, %s250
      %p252 = pneg %p81
      %p253 = pneg %p78
      %p254 = pneg %p102
      %p255 = pneg %p99
      %p256 = pneg %p123
      %p257 = pneg %p120
      %p258 = pneg %p144
      %p259 = pneg %p141
      %p260 = pneg %p165
      %p261 = pneg %p162
      %p262 = pneg %p191
      %p263 = pneg %p188
      %p264 = scmp.lt.s32.totalorder %s18, 1
      %s265 = scalar_select %p264, %s18, 1
      %s266 = smul.addr %s265, 2
      %s267 = smul.addr %s266, 8
      %s268 = scalar_lea.vmem %s7, %s267
      %p269 = scmp.lt.s32.totalorder %s18, 1
      %s270 = scalar_select %p269, %s18, 1
      %s271 = smul.addr %s270, 2
      %s272 = smul.addr %s271, 8
      %s273 = scalar_lea.vmem %s2, %s272
      %p274 = scmp.lt.s32.totalorder %s18, 1
      %s275 = scalar_select %p274, %s18, 1
      %s276 = smul.addr %s275, 2
      %s277 = smul.addr %s276, 8
      %s278 = scalar_lea.vmem %s7, %s277
      %v279 = vld [vmem:[%s273] sm:$0xff]
      %v280 = vld [vmem:[%s273 + $0x8] sm:$0xff]
      %v281 = vld [vmem:[%s0] sm:$0x1]
      %v283 = vlaneseq
      %v284 = vshrl.u32 %v283, 7
      %v285 = vsub.s32 0, %v284
      %v286 = vrot.slane %v281, %v285
      %v288 = vmul.f32 %v279, %v286
      %v289 = vmul.f32 %v280, %v286
      %v290 = vld [vmem:[%s1] sm:$0x1]
      %v292 = vlaneseq
      %v293 = vshrl.u32 %v292, 7
      %v294 = vsub.s32 0, %v293
      %v295 = vrot.slane %v290, %v294
      %v297 = vadd.f32 %v288, %v295
      %v298 = vadd.f32 %v289, %v295
      %v299 = vmax.f32 %v297, 0.0
      %v300 = vmax.f32 %v298, 0.0
      %vm301 = vcmask 588800
      %302 = vst.msk [vmem:[#allocation2] sm:$0xff] %vm301, 0.0
      %303 = vst.msk [vmem:[#allocation2 + $0x8] sm:$0xff] %vm301, 0.0
      %vm304 = vcmask 582656
      %305 = vst.msk [vmem:[#allocation2 + $0x10] sm:$0x3] %vm304, 0.0
      %308 = vrot.lane.b32.xlu0 %v299, 4
      %v309 = vpop.permute.xlu0 %308
      %310 = vrot.lane.b32.xlu0 %v300, 4
      %v311 = vpop.permute.xlu0 %310
      %vm314 = vcmask 556064
      %315 = vst.msk [vmem:[#allocation2 + $0x1] sm:$0xff] %vm314, %v309
      %316 = vst.msk [vmem:[#allocation2 + $0x9] sm:$0xff] %vm314, %v311
      %v317 = vld [vmem:[#allocation2] sm:$0xff]
      %v318 = vld [vmem:[#allocation2 + $0x8] sm:$0xff]
      %v319 = vld [vmem:[%s3] sm:$0xff]
      %v320 = vld [vmem:[%s3 + $0x8] sm:$0xff]
      %v321 = vld [vmem:[%s3 + $0x10] sm:$0xff]
      %v322 = vld [vmem:[%s3 + $0x18] sm:$0xff]
      %v323 = vld [vmem:[%s3 + $0x20] sm:$0xff]
      %v324 = vld [vmem:[%s3 + $0x28] sm:$0xff]
      %v325 = vld [vmem:[%s3 + $0x30] sm:$0xff]
      %v326 = vld [vmem:[%s3 + $0x38] sm:$0xff]
      %v327 = vld [vmem:[%s3 + $0x40] sm:$0xff]
      %v328 = vld [vmem:[#allocation2 + $0x1] sm:$0xff]
      %v329 = vld [vmem:[#allocation2 + $0x9] sm:$0xff]
      %s330 = scalar_lea.vmem %s3, 72
      %v331 = vld [vmem:[%s330] sm:$0xff]
      %v332 = vld [vmem:[%s330 + $0x8] sm:$0xff]
      %v333 = vld [vmem:[%s330 + $0x10] sm:$0xff]
      %v334 = vld [vmem:[%s330 + $0x18] sm:$0xff]
      %v335 = vld [vmem:[%s330 + $0x20] sm:$0xff]
      %v336 = vld [vmem:[%s330 + $0x28] sm:$0xff]
      %v337 = vld [vmem:[%s330 + $0x30] sm:$0xff]
      %v338 = vld [vmem:[%s330 + $0x38] sm:$0xff]
      %v339 = vld [vmem:[%s330 + $0x40] sm:$0xff]
      %v341 = vsel %vm301, %v328, 0
      %v344 = vsel %vm301, %v329, 0
      %346 = vmatprep.subr.mxu0 0.0
      %347 = vmatpush1.msra.mxu0 0.0
      %348 = vmatprep.subr.mxu0 0.0
      %349 = vmatpush1.msra.mxu0 0.0
      %350 = vmatprep.subr.mxu0 0.0
      %351 = vmatpush1.msra.mxu0 0.0
      %352 = vmatprep.subr.mxu0 0.0
      %353 = vmatpush1.msra.mxu0 0.0
      %354 = vmatprep.subr.mxu0 0.0
      %355 = vmatpush1.msra.mxu0 0.0
      %356 = vmatprep.subr.mxu0 0.0
      %357 = vmatpush1.msra.mxu0 0.0
      %358 = vmatprep.subr.mxu0 0.0
      %359 = vmatpush1.msra.mxu0 0.0
      %360 = vmatprep.subr.mxu0 0.0
      %361 = vmatpush1.msra.mxu0 %v339
      %362 = vmatprep.subr.mxu0 0.0
      %363 = vmatpush1.msra.mxu0 %v338
      %364 = vmatprep.subr.mxu0 0.0
      %365 = vmatpush1.msra.mxu0 %v337
      %366 = vmatprep.subr.mxu0 0.0
      %367 = vmatpush1.msra.mxu0 %v336
      %368 = vmatprep.subr.mxu0 0.0
      %369 = vmatpush1.msra.mxu0 %v335
      %370 = vmatprep.subr.mxu0 0.0
      %371 = vmatpush1.msra.mxu0 %v334
      %372 = vmatprep.subr.mxu0 0.0
      %373 = vmatpush1.msra.mxu0 %v333
      %374 = vmatprep.subr.mxu0 0.0
      %375 = vmatpush1.msra.mxu0 %v332
      %376 = vmatprep.subr.mxu0 0.0
      %377 = vmatpush1.msra.mxu0 %v331
      %378 = vmatprep.subr.mxu0 0.0
      %379 = vmatpush2.msra.mxu0 0.0
      %380 = vmatprep.subr.mxu0 0.0
      %381 = vmatpush2.msra.mxu0 0.0
      %382 = vmatprep.subr.mxu0 0.0
      %383 = vmatpush2.msra.mxu0 0.0
      %384 = vmatprep.subr.mxu0 0.0
      %385 = vmatpush2.msra.mxu0 0.0
      %386 = vmatprep.subr.mxu0 0.0
      %387 = vmatpush2.msra.mxu0 0.0
      %388 = vmatprep.subr.mxu0 0.0
      %389 = vmatpush2.msra.mxu0 0.0
      %390 = vmatprep.subr.mxu0 0.0
      %391 = vmatpush2.msra.mxu0 0.0
      %392 = vmatprep.subr.mxu0 0.0
      %393 = vmatpush2.msra.mxu0 0.0
      %394 = vmatprep.subr.mxu0 0.0
      %395 = vmatpush2.msra.mxu0 0.0
      %396 = vmatprep.subr.mxu0 0.0
      %397 = vmatpush2.msra.mxu0 0.0
      %398 = vmatprep.subr.mxu0 0.0
      %399 = vmatpush2.msra.mxu0 0.0
      %400 = vmatprep.subr.mxu0 0.0
      %401 = vmatpush2.msra.mxu0 0.0
      %402 = vmatprep.subr.mxu0 0.0
      %403 = vmatpush2.msra.mxu0 0.0
      %404 = vmatprep.subr.mxu0 0.0
      %405 = vmatpush2.msra.mxu0 0.0
      %406 = vmatprep.subr.mxu0 0.0
      %407 = vmatpush2.msra.mxu0 0.0
      %408 = vmatprep.subr.mxu0 0.0
      %409 = vmatpush2.msra.mxu0 0.0
      %410 = vmatprep.mubr.f32.mxu0 0.0
      %411 = vmatmul.mubr.f32.gmra.mxu0 %v341
      %v412 = vpop.f32.mrf.mxu0
      %v413 = vadd.f32 0.0, %v412
      %v414 = vpop.f32.mrf.mxu0
      %415 = vmatprep.mubr.f32.mxu0 0.0
      %416 = vmatmul.mubr.f32.gmra.mxu0 %v344
      %v417 = vpop.f32.mrf.mxu0
      %v418 = vadd.f32 0.0, %v417
      %v419 = vpop.f32.mrf.mxu0
      %420 = vdwg.mxu0
      %v422 = vsel %vm301, %v317, 0
      %v425 = vsel %vm301, %v318, 0
      %427 = vmatprep.subr.mxu0 0.0
      %428 = vmatpush1.msra.mxu0 0.0
      %429 = vmatprep.subr.mxu0 0.0
      %430 = vmatpush1.msra.mxu0 0.0
      %431 = vmatprep.subr.mxu0 0.0
      %432 = vmatpush1.msra.mxu0 0.0
      %433 = vmatprep.subr.mxu0 0.0
      %434 = vmatpush1.msra.mxu0 0.0
      %435 = vmatprep.subr.mxu0 0.0
      %436 = vmatpush1.msra.mxu0 0.0
      %437 = vmatprep.subr.mxu0 0.0
      %438 = vmatpush1.msra.mxu0 0.0
      %439 = vmatprep.subr.mxu0 0.0
      %440 = vmatpush1.msra.mxu0 0.0
      %441 = vmatprep.subr.mxu0 0.0
      %442 = vmatpush1.msra.mxu0 %v327
      %443 = vmatprep.subr.mxu0 0.0
      %444 = vmatpush1.msra.mxu0 %v326
      %445 = vmatprep.subr.mxu0 0.0
      %446 = vmatpush1.msra.mxu0 %v325
      %447 = vmatprep.subr.mxu0 0.0
      %448 = vmatpush1.msra.mxu0 %v324
      %449 = vmatprep.subr.mxu0 0.0
      %450 = vmatpush1.msra.mxu0 %v323
      %451 = vmatprep.subr.mxu0 0.0
      %452 = vmatpush1.msra.mxu0 %v322
      %453 = vmatprep.subr.mxu0 0.0
      %454 = vmatpush1.msra.mxu0 %v321
      %455 = vmatprep.subr.mxu0 0.0
      %456 = vmatpush1.msra.mxu0 %v320
      %457 = vmatprep.subr.mxu0 0.0
      %458 = vmatpush1.msra.mxu0 %v319
      %459 = vmatprep.subr.mxu0 0.0
      %460 = vmatpush2.msra.mxu0 0.0
      %461 = vmatprep.subr.mxu0 0.0
      %462 = vmatpush2.msra.mxu0 0.0
      %463 = vmatprep.subr.mxu0 0.0
      %464 = vmatpush2.msra.mxu0 0.0
      %465 = vmatprep.subr.mxu0 0.0
      %466 = vmatpush2.msra.mxu0 0.0
      %467 = vmatprep.subr.mxu0 0.0
      %468 = vmatpush2.msra.mxu0 0.0
      %469 = vmatprep.subr.mxu0 0.0
      %470 = vmatpush2.msra.mxu0 0.0
      %471 = vmatprep.subr.mxu0 0.0
      %472 = vmatpush2.msra.mxu0 0.0
      %473 = vmatprep.subr.mxu0 0.0
      %474 = vmatpush2.msra.mxu0 0.0
      %475 = vmatprep.subr.mxu0 0.0
      %476 = vmatpush2.msra.mxu0 0.0
      %477 = vmatprep.subr.mxu0 0.0
      %478 = vmatpush2.msra.mxu0 0.0
      %479 = vmatprep.subr.mxu0 0.0
      %480 = vmatpush2.msra.mxu0 0.0
      %481 = vmatprep.subr.mxu0 0.0
      %482 = vmatpush2.msra.mxu0 0.0
      %483 = vmatprep.subr.mxu0 0.0
      %484 = vmatpush2.msra.mxu0 0.0
      %485 = vmatprep.subr.mxu0 0.0
      %486 = vmatpush2.msra.mxu0 0.0
      %487 = vmatprep.subr.mxu0 0.0
      %488 = vmatpush2.msra.mxu0 0.0
      %489 = vmatprep.subr.mxu0 0.0
      %490 = vmatpush2.msra.mxu0 0.0
      %491 = vmatprep.mubr.f32.mxu0 0.0
      %492 = vmatmul.mubr.f32.gmra.mxu0 %v422
      %v493 = vpop.f32.mrf.mxu0
      %v494 = vadd.f32 %v413, %v493
      %v495 = vpop.f32.mrf.mxu0
      %496 = vmatprep.mubr.f32.mxu0 0.0
      %497 = vmatmul.mubr.f32.gmra.mxu0 %v425
      %v498 = vpop.f32.mrf.mxu0
      %v499 = vadd.f32 %v418, %v498
      %v500 = vpop.f32.mrf.mxu0
      %501 = vdwg.mxu0
      %v502 = vld [vmem:[#allocation2 + $0x2] sm:$0xff]
      %v503 = vld [vmem:[#allocation2 + $0xa] sm:$0xff]
      %s504 = scalar_lea.vmem %s3, 144
      %v505 = vld [vmem:[%s504] sm:$0xff]
      %v506 = vld [vmem:[%s504 + $0x8] sm:$0xff]
      %v507 = vld [vmem:[%s504 + $0x10] sm:$0xff]
      %v508 = vld [vmem:[%s504 + $0x18] sm:$0xff]
      %v509 = vld [vmem:[%s504 + $0x20] sm:$0xff]
      %v510 = vld [vmem:[%s504 + $0x28] sm:$0xff]
      %v511 = vld [vmem:[%s504 + $0x30] sm:$0xff]
      %v512 = vld [vmem:[%s504 + $0x38] sm:$0xff]
      %v513 = vld [vmem:[%s504 + $0x40] sm:$0xff]
      %v515 = vsel %vm301, %v502, 0
      %v518 = vsel %vm301, %v503, 0
      %520 = vmatprep.subr.mxu0 0.0
      %521 = vmatpush1.msra.mxu0 0.0
      %522 = vmatprep.subr.mxu0 0.0
      %523 = vmatpush1.msra.mxu0 0.0
      %524 = vmatprep.subr.mxu0 0.0
      %525 = vmatpush1.msra.mxu0 0.0
      %526 = vmatprep.subr.mxu0 0.0
      %527 = vmatpush1.msra.mxu0 0.0
      %528 = vmatprep.subr.mxu0 0.0
      %529 = vmatpush1.msra.mxu0 0.0
      %530 = vmatprep.subr.mxu0 0.0
      %531 = vmatpush1.msra.mxu0 0.0
      %532 = vmatprep.subr.mxu0 0.0
      %533 = vmatpush1.msra.mxu0 0.0
      %534 = vmatprep.subr.mxu0 0.0
      %535 = vmatpush1.msra.mxu0 %v513
      %536 = vmatprep.subr.mxu0 0.0
      %537 = vmatpush1.msra.mxu0 %v512
      %538 = vmatprep.subr.mxu0 0.0
      %539 = vmatpush1.msra.mxu0 %v511
      %540 = vmatprep.subr.mxu0 0.0
      %541 = vmatpush1.msra.mxu0 %v510
      %542 = vmatprep.subr.mxu0 0.0
      %543 = vmatpush1.msra.mxu0 %v509
      %544 = vmatprep.subr.mxu0 0.0
      %545 = vmatpush1.msra.mxu0 %v508
      %546 = vmatprep.subr.mxu0 0.0
      %547 = vmatpush1.msra.mxu0 %v507
      %548 = vmatprep.subr.mxu0 0.0
      %549 = vmatpush1.msra.mxu0 %v506
      %550 = vmatprep.subr.mxu0 0.0
      %551 = vmatpush1.msra.mxu0 %v505
      %552 = vmatprep.subr.mxu0 0.0
      %553 = vmatpush2.msra.mxu0 0.0
      %554 = vmatprep.subr.mxu0 0.0
      %555 = vmatpush2.msra.mxu0 0.0
      %556 = vmatprep.subr.mxu0 0.0
      %557 = vmatpush2.msra.mxu0 0.0
      %558 = vmatprep.subr.mxu0 0.0
      %559 = vmatpush2.msra.mxu0 0.0
      %560 = vmatprep.subr.mxu0 0.0
      %561 = vmatpush2.msra.mxu0 0.0
      %562 = vmatprep.subr.mxu0 0.0
      %563 = vmatpush2.msra.mxu0 0.0
      %564 = vmatprep.subr.mxu0 0.0
      %565 = vmatpush2.msra.mxu0 0.0
      %566 = vmatprep.subr.mxu0 0.0
      %567 = vmatpush2.msra.mxu0 0.0
      %568 = vmatprep.subr.mxu0 0.0
      %569 = vmatpush2.msra.mxu0 0.0
      %570 = vmatprep.subr.mxu0 0.0
      %571 = vmatpush2.msra.mxu0 0.0
      %572 = vmatprep.subr.mxu0 0.0
      %573 = vmatpush2.msra.mxu0 0.0
      %574 = vmatprep.subr.mxu0 0.0
      %575 = vmatpush2.msra.mxu0 0.0
      %576 = vmatprep.subr.mxu0 0.0
      %577 = vmatpush2.msra.mxu0 0.0
      %578 = vmatprep.subr.mxu0 0.0
      %579 = vmatpush2.msra.mxu0 0.0
      %580 = vmatprep.subr.mxu0 0.0
      %581 = vmatpush2.msra.mxu0 0.0
      %582 = vmatprep.subr.mxu0 0.0
      %583 = vmatpush2.msra.mxu0 0.0
      %584 = vmatprep.mubr.f32.mxu0 0.0
      %585 = vmatmul.mubr.f32.gmra.mxu0 %v515
      %v586 = vpop.f32.mrf.mxu0
      %v587 = vadd.f32 0.0, %v586
      %v588 = vpop.f32.mrf.mxu0
      %589 = vmatprep.mubr.f32.mxu0 0.0
      %590 = vmatmul.mubr.f32.gmra.mxu0 %v518
      %v591 = vpop.f32.mrf.mxu0
      %v592 = vadd.f32 0.0, %v591
      %v593 = vpop.f32.mrf.mxu0
      %594 = vdwg.mxu0
      %v595 = vadd.f32 %v494, %v587
      %v596 = vadd.f32 %v499, %v592
      %v597 = vmax.f32 %v595, 0.0
      %v598 = vmax.f32 %v596, 0.0
      %601 = vrot.lane.b32.xlu0 %v597, 4
      %v602 = vpop.permute.xlu0 %601
      %603 = vrot.lane.b32.xlu0 %v598, 4
      %v604 = vpop.permute.xlu0 %603
      %607 = vst.msk [vmem:[#allocation2 + $0x1] sm:$0xff] %vm314, %v602
      %608 = vst.msk [vmem:[#allocation2 + $0x9] sm:$0xff] %vm314, %v604
      %v609 = vld [vmem:[#allocation2] sm:$0xff]
      %v610 = vld [vmem:[#allocation2 + $0x8] sm:$0xff]
      %v611 = vld [vmem:[%s4] sm:$0xff]
      %v612 = vld [vmem:[%s4 + $0x8] sm:$0xff]
      %v613 = vld [vmem:[%s4 + $0x10] sm:$0xff]
      %v614 = vld [vmem:[%s4 + $0x18] sm:$0xff]
      %v615 = vld [vmem:[%s4 + $0x20] sm:$0xff]
      %v616 = vld [vmem:[%s4 + $0x28] sm:$0xff]
      %v617 = vld [vmem:[%s4 + $0x30] sm:$0xff]
      %v618 = vld [vmem:[%s4 + $0x38] sm:$0xff]
      %v619 = vld [vmem:[%s4 + $0x40] sm:$0xff]
      %v620 = vld [vmem:[#allocation2 + $0x1] sm:$0xff]
      %v621 = vld [vmem:[#allocation2 + $0x9] sm:$0xff]
      %s622 = scalar_lea.vmem %s4, 72
      %v623 = vld [vmem:[%s622] sm:$0xff]
      %v624 = vld [vmem:[%s622 + $0x8] sm:$0xff]
      %v625 = vld [vmem:[%s622 + $0x10] sm:$0xff]
      %v626 = vld [vmem:[%s622 + $0x18] sm:$0xff]
      %v627 = vld [vmem:[%s622 + $0x20] sm:$0xff]
      %v628 = vld [vmem:[%s622 + $0x28] sm:$0xff]
      %v629 = vld [vmem:[%s622 + $0x30] sm:$0xff]
      %v630 = vld [vmem:[%s622 + $0x38] sm:$0xff]
      %v631 = vld [vmem:[%s622 + $0x40] sm:$0xff]
      %v633 = vsel %vm301, %v620, 0
      %v636 = vsel %vm301, %v621, 0
      %638 = vmatprep.subr.mxu0 0.0
      %639 = vmatpush1.msra.mxu0 0.0
      %640 = vmatprep.subr.mxu0 0.0
      %641 = vmatpush1.msra.mxu0 0.0
      %642 = vmatprep.subr.mxu0 0.0
      %643 = vmatpush1.msra.mxu0 0.0
      %644 = vmatprep.subr.mxu0 0.0
      %645 = vmatpush1.msra.mxu0 0.0
      %646 = vmatprep.subr.mxu0 0.0
      %647 = vmatpush1.msra.mxu0 0.0
      %648 = vmatprep.subr.mxu0 0.0
      %649 = vmatpush1.msra.mxu0 0.0
      %650 = vmatprep.subr.mxu0 0.0
      %651 = vmatpush1.msra.mxu0 0.0
      %652 = vmatprep.subr.mxu0 0.0
      %653 = vmatpush1.msra.mxu0 %v631
      %654 = vmatprep.subr.mxu0 0.0
      %655 = vmatpush1.msra.mxu0 %v630
      %656 = vmatprep.subr.mxu0 0.0
      %657 = vmatpush1.msra.mxu0 %v629
      %658 = vmatprep.subr.mxu0 0.0
      %659 = vmatpush1.msra.mxu0 %v628
      %660 = vmatprep.subr.mxu0 0.0
      %661 = vmatpush1.msra.mxu0 %v627
      %662 = vmatprep.subr.mxu0 0.0
      %663 = vmatpush1.msra.mxu0 %v626
      %664 = vmatprep.subr.mxu0 0.0
      %665 = vmatpush1.msra.mxu0 %v625
      %666 = vmatprep.subr.mxu0 0.0
      %667 = vmatpush1.msra.mxu0 %v624
      %668 = vmatprep.subr.mxu0 0.0
      %669 = vmatpush1.msra.mxu0 %v623
      %670 = vmatprep.subr.mxu0 0.0
      %671 = vmatpush2.msra.mxu0 0.0
      %672 = vmatprep.subr.mxu0 0.0
      %673 = vmatpush2.msra.mxu0 0.0
      %674 = vmatprep.subr.mxu0 0.0
      %675 = vmatpush2.msra.mxu0 0.0
      %676 = vmatprep.subr.mxu0 0.0
      %677 = vmatpush2.msra.mxu0 0.0
      %678 = vmatprep.subr.mxu0 0.0
      %679 = vmatpush2.msra.mxu0 0.0
      %680 = vmatprep.subr.mxu0 0.0
      %681 = vmatpush2.msra.mxu0 0.0
      %682 = vmatprep.subr.mxu0 0.0
      %683 = vmatpush2.msra.mxu0 0.0
      %684 = vmatprep.subr.mxu0 0.0
      %685 = vmatpush2.msra.mxu0 0.0
      %686 = vmatprep.subr.mxu0 0.0
      %687 = vmatpush2.msra.mxu0 0.0
      %688 = vmatprep.subr.mxu0 0.0
      %689 = vmatpush2.msra.mxu0 0.0
      %690 = vmatprep.subr.mxu0 0.0
      %691 = vmatpush2.msra.mxu0 0.0
      %692 = vmatprep.subr.mxu0 0.0
      %693 = vmatpush2.msra.mxu0 0.0
      %694 = vmatprep.subr.mxu0 0.0
      %695 = vmatpush2.msra.mxu0 0.0
      %696 = vmatprep.subr.mxu0 0.0
      %697 = vmatpush2.msra.mxu0 0.0
      %698 = vmatprep.subr.mxu0 0.0
      %699 = vmatpush2.msra.mxu0 0.0
      %700 = vmatprep.subr.mxu0 0.0
      %701 = vmatpush2.msra.mxu0 0.0
      %702 = vmatprep.mubr.f32.mxu0 0.0
      %703 = vmatmul.mubr.f32.gmra.mxu0 %v633
      %v704 = vpop.f32.mrf.mxu0
      %v705 = vadd.f32 0.0, %v704
      %v706 = vpop.f32.mrf.mxu0
      %707 = vmatprep.mubr.f32.mxu0 0.0
      %708 = vmatmul.mubr.f32.gmra.mxu0 %v636
      %v709 = vpop.f32.mrf.mxu0
      %v710 = vadd.f32 0.0, %v709
      %v711 = vpop.f32.mrf.mxu0
      %712 = vdwg.mxu0
      %v714 = vsel %vm301, %v609, 0
      %v717 = vsel %vm301, %v610, 0
      %719 = vmatprep.subr.mxu0 0.0
      %720 = vmatpush1.msra.mxu0 0.0
      %721 = vmatprep.subr.mxu0 0.0
      %722 = vmatpush1.msra.mxu0 0.0
      %723 = vmatprep.subr.mxu0 0.0
      %724 = vmatpush1.msra.mxu0 0.0
      %725 = vmatprep.subr.mxu0 0.0
      %726 = vmatpush1.msra.mxu0 0.0
      %727 = vmatprep.subr.mxu0 0.0
      %728 = vmatpush1.msra.mxu0 0.0
      %729 = vmatprep.subr.mxu0 0.0
      %730 = vmatpush1.msra.mxu0 0.0
      %731 = vmatprep.subr.mxu0 0.0
      %732 = vmatpush1.msra.mxu0 0.0
      %733 = vmatprep.subr.mxu0 0.0
      %734 = vmatpush1.msra.mxu0 %v619
      %735 = vmatprep.subr.mxu0 0.0
      %736 = vmatpush1.msra.mxu0 %v618
      %737 = vmatprep.subr.mxu0 0.0
      %738 = vmatpush1.msra.mxu0 %v617
      %739 = vmatprep.subr.mxu0 0.0
      %740 = vmatpush1.msra.mxu0 %v616
      %741 = vmatprep.subr.mxu0 0.0
      %742 = vmatpush1.msra.mxu0 %v615
      %743 = vmatprep.subr.mxu0 0.0
      %744 = vmatpush1.msra.mxu0 %v614
      %745 = vmatprep.subr.mxu0 0.0
      %746 = vmatpush1.msra.mxu0 %v613
      %747 = vmatprep.subr.mxu0 0.0
      %748 = vmatpush1.msra.mxu0 %v612
      %749 = vmatprep.subr.mxu0 0.0
      %750 = vmatpush1.msra.mxu0 %v611
      %751 = vmatprep.subr.mxu0 0.0
      %752 = vmatpush2.msra.mxu0 0.0
      %753 = vmatprep.subr.mxu0 0.0
      %754 = vmatpush2.msra.mxu0 0.0
      %755 = vmatprep.subr.mxu0 0.0
      %756 = vmatpush2.msra.mxu0 0.0
      %757 = vmatprep.subr.mxu0 0.0
      %758 = vmatpush2.msra.mxu0 0.0
      %759 = vmatprep.subr.mxu0 0.0
      %760 = vmatpush2.msra.mxu0 0.0
      %761 = vmatprep.subr.mxu0 0.0
      %762 = vmatpush2.msra.mxu0 0.0
      %763 = vmatprep.subr.mxu0 0.0
      %764 = vmatpush2.msra.mxu0 0.0
      %765 = vmatprep.subr.mxu0 0.0
      %766 = vmatpush2.msra.mxu0 0.0
      %767 = vmatprep.subr.mxu0 0.0
      %768 = vmatpush2.msra.mxu0 0.0
      %769 = vmatprep.subr.mxu0 0.0
      %770 = vmatpush2.msra.mxu0 0.0
      %771 = vmatprep.subr.mxu0 0.0
      %772 = vmatpush2.msra.mxu0 0.0
      %773 = vmatprep.subr.mxu0 0.0
      %774 = vmatpush2.msra.mxu0 0.0
      %775 = vmatprep.subr.mxu0 0.0
      %776 = vmatpush2.msra.mxu0 0.0
      %777 = vmatprep.subr.mxu0 0.0
      %778 = vmatpush2.msra.mxu0 0.0
      %779 = vmatprep.subr.mxu0 0.0
      %780 = vmatpush2.msra.mxu0 0.0
      %781 = vmatprep.subr.mxu0 0.0
      %782 = vmatpush2.msra.mxu0 0.0
      %783 = vmatprep.mubr.f32.mxu0 0.0
      %784 = vmatmul.mubr.f32.gmra.mxu0 %v714
      %v785 = vpop.f32.mrf.mxu0
      %v786 = vadd.f32 %v705, %v785
      %v787 = vpop.f32.mrf.mxu0
      %788 = vmatprep.mubr.f32.mxu0 0.0
      %789 = vmatmul.mubr.f32.gmra.mxu0 %v717
      %v790 = vpop.f32.mrf.mxu0
      %v791 = vadd.f32 %v710, %v790
      %v792 = vpop.f32.mrf.mxu0
      %793 = vdwg.mxu0
      %v794 = vld [vmem:[#allocation2 + $0x2] sm:$0xff]
      %v795 = vld [vmem:[#allocation2 + $0xa] sm:$0xff]
      %s796 = scalar_lea.vmem %s4, 144
      %v797 = vld [vmem:[%s796] sm:$0xff]
      %v798 = vld [vmem:[%s796 + $0x8] sm:$0xff]
      %v799 = vld [vmem:[%s796 + $0x10] sm:$0xff]
      %v800 = vld [vmem:[%s796 + $0x18] sm:$0xff]
      %v801 = vld [vmem:[%s796 + $0x20] sm:$0xff]
      %v802 = vld [vmem:[%s796 + $0x28] sm:$0xff]
      %v803 = vld [vmem:[%s796 + $0x30] sm:$0xff]
      %v804 = vld [vmem:[%s796 + $0x38] sm:$0xff]
      %v805 = vld [vmem:[%s796 + $0x40] sm:$0xff]
      %v807 = vsel %vm301, %v794, 0
      %v810 = vsel %vm301, %v795, 0
      %812 = vmatprep.subr.mxu0 0.0
      %813 = vmatpush1.msra.mxu0 0.0
      %814 = vmatprep.subr.mxu0 0.0
      %815 = vmatpush1.msra.mxu0 0.0
      %816 = vmatprep.subr.mxu0 0.0
      %817 = vmatpush1.msra.mxu0 0.0
      %818 = vmatprep.subr.mxu0 0.0
      %819 = vmatpush1.msra.mxu0 0.0
      %820 = vmatprep.subr.mxu0 0.0
      %821 = vmatpush1.msra.mxu0 0.0
      %822 = vmatprep.subr.mxu0 0.0
      %823 = vmatpush1.msra.mxu0 0.0
      %824 = vmatprep.subr.mxu0 0.0
      %825 = vmatpush1.msra.mxu0 0.0
      %826 = vmatprep.subr.mxu0 0.0
      %827 = vmatpush1.msra.mxu0 %v805
      %828 = vmatprep.subr.mxu0 0.0
      %829 = vmatpush1.msra.mxu0 %v804
      %830 = vmatprep.subr.mxu0 0.0
      %831 = vmatpush1.msra.mxu0 %v803
      %832 = vmatprep.subr.mxu0 0.0
      %833 = vmatpush1.msra.mxu0 %v802
      %834 = vmatprep.subr.mxu0 0.0
      %835 = vmatpush1.msra.mxu0 %v801
      %836 = vmatprep.subr.mxu0 0.0
      %837 = vmatpush1.msra.mxu0 %v800
      %838 = vmatprep.subr.mxu0 0.0
      %839 = vmatpush1.msra.mxu0 %v799
      %840 = vmatprep.subr.mxu0 0.0
      %841 = vmatpush1.msra.mxu0 %v798
      %842 = vmatprep.subr.mxu0 0.0
      %843 = vmatpush1.msra.mxu0 %v797
      %844 = vmatprep.subr.mxu0 0.0
      %845 = vmatpush2.msra.mxu0 0.0
      %846 = vmatprep.subr.mxu0 0.0
      %847 = vmatpush2.msra.mxu0 0.0
      %848 = vmatprep.subr.mxu0 0.0
      %849 = vmatpush2.msra.mxu0 0.0
      %850 = vmatprep.subr.mxu0 0.0
      %851 = vmatpush2.msra.mxu0 0.0
      %852 = vmatprep.subr.mxu0 0.0
      %853 = vmatpush2.msra.mxu0 0.0
      %854 = vmatprep.subr.mxu0 0.0
      %855 = vmatpush2.msra.mxu0 0.0
      %856 = vmatprep.subr.mxu0 0.0
      %857 = vmatpush2.msra.mxu0 0.0
      %858 = vmatprep.subr.mxu0 0.0
      %859 = vmatpush2.msra.mxu0 0.0
      %860 = vmatprep.subr.mxu0 0.0
      %861 = vmatpush2.msra.mxu0 0.0
      %862 = vmatprep.subr.mxu0 0.0
      %863 = vmatpush2.msra.mxu0 0.0
      %864 = vmatprep.subr.mxu0 0.0
      %865 = vmatpush2.msra.mxu0 0.0
      %866 = vmatprep.subr.mxu0 0.0
      %867 = vmatpush2.msra.mxu0 0.0
      %868 = vmatprep.subr.mxu0 0.0
      %869 = vmatpush2.msra.mxu0 0.0
      %870 = vmatprep.subr.mxu0 0.0
      %871 = vmatpush2.msra.mxu0 0.0
      %872 = vmatprep.subr.mxu0 0.0
      %873 = vmatpush2.msra.mxu0 0.0
      %874 = vmatprep.subr.mxu0 0.0
      %875 = vmatpush2.msra.mxu0 0.0
      %876 = vmatprep.mubr.f32.mxu0 0.0
      %877 = vmatmul.mubr.f32.gmra.mxu0 %v807
      %v878 = vpop.f32.mrf.mxu0
      %v879 = vadd.f32 0.0, %v878
      %v880 = vpop.f32.mrf.mxu0
      %881 = vmatprep.mubr.f32.mxu0 0.0
      %882 = vmatmul.mubr.f32.gmra.mxu0 %v810
      %v883 = vpop.f32.mrf.mxu0
      %v884 = vadd.f32 0.0, %v883
      %v885 = vpop.f32.mrf.mxu0
      %886 = vdwg.mxu0
      %v887 = vadd.f32 %v786, %v879
      %v888 = vadd.f32 %v791, %v884
      %v889 = vmax.f32 %v887, 0.0
      %v890 = vmax.f32 %v888, 0.0
      %893 = vrot.lane.b32.xlu0 %v889, 4
      %v894 = vpop.permute.xlu0 %893
      %895 = vrot.lane.b32.xlu0 %v890, 4
      %v896 = vpop.permute.xlu0 %895
      %899 = vst.msk [vmem:[#allocation2 + $0x1] sm:$0xff] %vm314, %v894
      %900 = vst.msk [vmem:[#allocation2 + $0x9] sm:$0xff] %vm314, %v896
      %v901 = vld [vmem:[#allocation2] sm:$0xff]
      %v902 = vld [vmem:[#allocation2 + $0x8] sm:$0xff]
      %v903 = vld [vmem:[%s5] sm:$0xff]
      %v904 = vld [vmem:[%s5 + $0x8] sm:$0xff]
      %v905 = vld [vmem:[%s5 + $0x10] sm:$0xff]
      %v906 = vld [vmem:[%s5 + $0x18] sm:$0xff]
      %v907 = vld [vmem:[%s5 + $0x20] sm:$0xff]
      %v908 = vld [vmem:[%s5 + $0x28] sm:$0xff]
      %v909 = vld [vmem:[%s5 + $0x30] sm:$0xff]
      %v910 = vld [vmem:[%s5 + $0x38] sm:$0xff]
      %v911 = vld [vmem:[%s5 + $0x40] sm:$0xff]
      %v912 = vld [vmem:[#allocation2 + $0x1] sm:$0xff]
      %v913 = vld [vmem:[#allocation2 + $0x9] sm:$0xff]
      %s914 = scalar_lea.vmem %s5, 72
      %v915 = vld [vmem:[%s914] sm:$0xff]
      %v916 = vld [vmem:[%s914 + $0x8] sm:$0xff]
      %v917 = vld [vmem:[%s914 + $0x10] sm:$0xff]
      %v918 = vld [vmem:[%s914 + $0x18] sm:$0xff]
      %v919 = vld [vmem:[%s914 + $0x20] sm:$0xff]
      %v920 = vld [vmem:[%s914 + $0x28] sm:$0xff]
      %v921 = vld [vmem:[%s914 + $0x30] sm:$0xff]
      %v922 = vld [vmem:[%s914 + $0x38] sm:$0xff]
      %v923 = vld [vmem:[%s914 + $0x40] sm:$0xff]
      %v925 = vsel %vm301, %v912, 0
      %v928 = vsel %vm301, %v913, 0
      %930 = vmatprep.subr.mxu0 0.0
      %931 = vmatpush1.msra.mxu0 0.0
      %932 = vmatprep.subr.mxu0 0.0
      %933 = vmatpush1.msra.mxu0 0.0
      %934 = vmatprep.subr.mxu0 0.0
      %935 = vmatpush1.msra.mxu0 0.0
      %936 = vmatprep.subr.mxu0 0.0
      %937 = vmatpush1.msra.mxu0 0.0
      %938 = vmatprep.subr.mxu0 0.0
      %939 = vmatpush1.msra.mxu0 0.0
      %940 = vmatprep.subr.mxu0 0.0
      %941 = vmatpush1.msra.mxu0 0.0
      %942 = vmatprep.subr.mxu0 0.0
      %943 = vmatpush1.msra.mxu0 0.0
      %944 = vmatprep.subr.mxu0 0.0
      %945 = vmatpush1.msra.mxu0 %v923
      %946 = vmatprep.subr.mxu0 0.0
      %947 = vmatpush1.msra.mxu0 %v922
      %948 = vmatprep.subr.mxu0 0.0
      %949 = vmatpush1.msra.mxu0 %v921
      %950 = vmatprep.subr.mxu0 0.0
      %951 = vmatpush1.msra.mxu0 %v920
      %952 = vmatprep.subr.mxu0 0.0
      %953 = vmatpush1.msra.mxu0 %v919
      %954 = vmatprep.subr.mxu0 0.0
      %955 = vmatpush1.msra.mxu0 %v918
      %956 = vmatprep.subr.mxu0 0.0
      %957 = vmatpush1.msra.mxu0 %v917
      %958 = vmatprep.subr.mxu0 0.0
      %959 = vmatpush1.msra.mxu0 %v916
      %960 = vmatprep.subr.mxu0 0.0
      %961 = vmatpush1.msra.mxu0 %v915
      %962 = vmatprep.subr.mxu0 0.0
      %963 = vmatpush2.msra.mxu0 0.0
      %964 = vmatprep.subr.mxu0 0.0
      %965 = vmatpush2.msra.mxu0 0.0
      %966 = vmatprep.subr.mxu0 0.0
      %967 = vmatpush2.msra.mxu0 0.0
      %968 = vmatprep.subr.mxu0 0.0
      %969 = vmatpush2.msra.mxu0 0.0
      %970 = vmatprep.subr.mxu0 0.0
      %971 = vmatpush2.msra.mxu0 0.0
      %972 = vmatprep.subr.mxu0 0.0
      %973 = vmatpush2.msra.mxu0 0.0
      %974 = vmatprep.subr.mxu0 0.0
      %975 = vmatpush2.msra.mxu0 0.0
      %976 = vmatprep.subr.mxu0 0.0
      %977 = vmatpush2.msra.mxu0 0.0
      %978 = vmatprep.subr.mxu0 0.0
      %979 = vmatpush2.msra.mxu0 0.0
      %980 = vmatprep.subr.mxu0 0.0
      %981 = vmatpush2.msra.mxu0 0.0
      %982 = vmatprep.subr.mxu0 0.0
      %983 = vmatpush2.msra.mxu0 0.0
      %984 = vmatprep.subr.mxu0 0.0
      %985 = vmatpush2.msra.mxu0 0.0
      %986 = vmatprep.subr.mxu0 0.0
      %987 = vmatpush2.msra.mxu0 0.0
      %988 = vmatprep.subr.mxu0 0.0
      %989 = vmatpush2.msra.mxu0 0.0
      %990 = vmatprep.subr.mxu0 0.0
      %991 = vmatpush2.msra.mxu0 0.0
      %992 = vmatprep.subr.mxu0 0.0
      %993 = vmatpush2.msra.mxu0 0.0
      %994 = vmatprep.mubr.f32.mxu0 0.0
      %995 = vmatmul.mubr.f32.gmra.mxu0 %v925
      %v996 = vpop.f32.mrf.mxu0
      %v997 = vadd.f32 0.0, %v996
      %v998 = vpop.f32.mrf.mxu0
      %999 = vmatprep.mubr.f32.mxu0 0.0
      %1000 = vmatmul.mubr.f32.gmra.mxu0 %v928
      %v1001 = vpop.f32.mrf.mxu0
      %v1002 = vadd.f32 0.0, %v1001
      %v1003 = vpop.f32.mrf.mxu0
      %1004 = vdwg.mxu0
      %v1006 = vsel %vm301, %v901, 0
      %v1009 = vsel %vm301, %v902, 0
      %1011 = vmatprep.subr.mxu0 0.0
      %1012 = vmatpush1.msra.mxu0 0.0
      %1013 = vmatprep.subr.mxu0 0.0
      %1014 = vmatpush1.msra.mxu0 0.0
      %1015 = vmatprep.subr.mxu0 0.0
      %1016 = vmatpush1.msra.mxu0 0.0
      %1017 = vmatprep.subr.mxu0 0.0
      %1018 = vmatpush1.msra.mxu0 0.0
      %1019 = vmatprep.subr.mxu0 0.0
      %1020 = vmatpush1.msra.mxu0 0.0
      %1021 = vmatprep.subr.mxu0 0.0
      %1022 = vmatpush1.msra.mxu0 0.0
      %1023 = vmatprep.subr.mxu0 0.0
      %1024 = vmatpush1.msra.mxu0 0.0
      %1025 = vmatprep.subr.mxu0 0.0
      %1026 = vmatpush1.msra.mxu0 %v911
      %1027 = vmatprep.subr.mxu0 0.0
      %1028 = vmatpush1.msra.mxu0 %v910
      %1029 = vmatprep.subr.mxu0 0.0
      %1030 = vmatpush1.msra.mxu0 %v909
      %1031 = vmatprep.subr.mxu0 0.0
      %1032 = vmatpush1.msra.mxu0 %v908
      %1033 = vmatprep.subr.mxu0 0.0
      %1034 = vmatpush1.msra.mxu0 %v907
      %1035 = vmatprep.subr.mxu0 0.0
      %1036 = vmatpush1.msra.mxu0 %v906
      %1037 = vmatprep.subr.mxu0 0.0
      %1038 = vmatpush1.msra.mxu0 %v905
      %1039 = vmatprep.subr.mxu0 0.0
      %1040 = vmatpush1.msra.mxu0 %v904
      %1041 = vmatprep.subr.mxu0 0.0
      %1042 = vmatpush1.msra.mxu0 %v903
      %1043 = vmatprep.subr.mxu0 0.0
      %1044 = vmatpush2.msra.mxu0 0.0
      %1045 = vmatprep.subr.mxu0 0.0
      %1046 = vmatpush2.msra.mxu0 0.0
      %1047 = vmatprep.subr.mxu0 0.0
      %1048 = vmatpush2.msra.mxu0 0.0
      %1049 = vmatprep.subr.mxu0 0.0
      %1050 = vmatpush2.msra.mxu0 0.0
      %1051 = vmatprep.subr.mxu0 0.0
      %1052 = vmatpush2.msra.mxu0 0.0
      %1053 = vmatprep.subr.mxu0 0.0
      %1054 = vmatpush2.msra.mxu0 0.0
      %1055 = vmatprep.subr.mxu0 0.0
      %1056 = vmatpush2.msra.mxu0 0.0
      %1057 = vmatprep.subr.mxu0 0.0
      %1058 = vmatpush2.msra.mxu0 0.0
      %1059 = vmatprep.subr.mxu0 0.0
      %1060 = vmatpush2.msra.mxu0 0.0
      %1061 = vmatprep.subr.mxu0 0.0
      %1062 = vmatpush2.msra.mxu0 0.0
      %1063 = vmatprep.subr.mxu0 0.0
      %1064 = vmatpush2.msra.mxu0 0.0
      %1065 = vmatprep.subr.mxu0 0.0
      %1066 = vmatpush2.msra.mxu0 0.0
      %1067 = vmatprep.subr.mxu0 0.0
      %1068 = vmatpush2.msra.mxu0 0.0
      %1069 = vmatprep.subr.mxu0 0.0
      %1070 = vmatpush2.msra.mxu0 0.0
      %1071 = vmatprep.subr.mxu0 0.0
      %1072 = vmatpush2.msra.mxu0 0.0
      %1073 = vmatprep.subr.mxu0 0.0
      %1074 = vmatpush2.msra.mxu0 0.0
      %1075 = vmatprep.mubr.f32.mxu0 0.0
      %1076 = vmatmul.mubr.f32.gmra.mxu0 %v1006
      %v1077 = vpop.f32.mrf.mxu0
      %v1078 = vadd.f32 %v997, %v1077
      %v1079 = vpop.f32.mrf.mxu0
      %1080 = vmatprep.mubr.f32.mxu0 0.0
      %1081 = vmatmul.mubr.f32.gmra.mxu0 %v1009
      %v1082 = vpop.f32.mrf.mxu0
      %v1083 = vadd.f32 %v1002, %v1082
      %v1084 = vpop.f32.mrf.mxu0
      %1085 = vdwg.mxu0
      %v1086 = vld [vmem:[#allocation2 + $0x2] sm:$0xff]
      %v1087 = vld [vmem:[#allocation2 + $0xa] sm:$0xff]
      %s1088 = scalar_lea.vmem %s5, 144
      %v1089 = vld [vmem:[%s1088] sm:$0xff]
      %v1090 = vld [vmem:[%s1088 + $0x8] sm:$0xff]
      %v1091 = vld [vmem:[%s1088 + $0x10] sm:$0xff]
      %v1092 = vld [vmem:[%s1088 + $0x18] sm:$0xff]
      %v1093 = vld [vmem:[%s1088 + $0x20] sm:$0xff]
      %v1094 = vld [vmem:[%s1088 + $0x28] sm:$0xff]
      %v1095 = vld [vmem:[%s1088 + $0x30] sm:$0xff]
      %v1096 = vld [vmem:[%s1088 + $0x38] sm:$0xff]
      %v1097 = vld [vmem:[%s1088 + $0x40] sm:$0xff]
      %v1099 = vsel %vm301, %v1086, 0
      %v1102 = vsel %vm301, %v1087, 0
      %1104 = vmatprep.subr.mxu0 0.0
      %1105 = vmatpush1.msra.mxu0 0.0
      %1106 = vmatprep.subr.mxu0 0.0
      %1107 = vmatpush1.msra.mxu0 0.0
      %1108 = vmatprep.subr.mxu0 0.0
      %1109 = vmatpush1.msra.mxu0 0.0
      %1110 = vmatprep.subr.mxu0 0.0
      %1111 = vmatpush1.msra.mxu0 0.0
      %1112 = vmatprep.subr.mxu0 0.0
      %1113 = vmatpush1.msra.mxu0 0.0
      %1114 = vmatprep.subr.mxu0 0.0
      %1115 = vmatpush1.msra.mxu0 0.0
      %1116 = vmatprep.subr.mxu0 0.0
      %1117 = vmatpush1.msra.mxu0 0.0
      %1118 = vmatprep.subr.mxu0 0.0
      %1119 = vmatpush1.msra.mxu0 %v1097
      %1120 = vmatprep.subr.mxu0 0.0
      %1121 = vmatpush1.msra.mxu0 %v1096
      %1122 = vmatprep.subr.mxu0 0.0
      %1123 = vmatpush1.msra.mxu0 %v1095
      %1124 = vmatprep.subr.mxu0 0.0
      %1125 = vmatpush1.msra.mxu0 %v1094
      %1126 = vmatprep.subr.mxu0 0.0
      %1127 = vmatpush1.msra.mxu0 %v1093
      %1128 = vmatprep.subr.mxu0 0.0
      %1129 = vmatpush1.msra.mxu0 %v1092
      %1130 = vmatprep.subr.mxu0 0.0
      %1131 = vmatpush1.msra.mxu0 %v1091
      %1132 = vmatprep.subr.mxu0 0.0
      %1133 = vmatpush1.msra.mxu0 %v1090
      %1134 = vmatprep.subr.mxu0 0.0
      %1135 = vmatpush1.msra.mxu0 %v1089
      %1136 = vmatprep.subr.mxu0 0.0
      %1137 = vmatpush2.msra.mxu0 0.0
      %1138 = vmatprep.subr.mxu0 0.0
      %1139 = vmatpush2.msra.mxu0 0.0
      %1140 = vmatprep.subr.mxu0 0.0
      %1141 = vmatpush2.msra.mxu0 0.0
      %1142 = vmatprep.subr.mxu0 0.0
      %1143 = vmatpush2.msra.mxu0 0.0
      %1144 = vmatprep.subr.mxu0 0.0
      %1145 = vmatpush2.msra.mxu0 0.0
      %1146 = vmatprep.subr.mxu0 0.0
      %1147 = vmatpush2.msra.mxu0 0.0
      %1148 = vmatprep.subr.mxu0 0.0
      %1149 = vmatpush2.msra.mxu0 0.0
      %1150 = vmatprep.subr.mxu0 0.0
      %1151 = vmatpush2.msra.mxu0 0.0
      %1152 = vmatprep.subr.mxu0 0.0
      %1153 = vmatpush2.msra.mxu0 0.0
      %1154 = vmatprep.subr.mxu0 0.0
      %1155 = vmatpush2.msra.mxu0 0.0
      %1156 = vmatprep.subr.mxu0 0.0
      %1157 = vmatpush2.msra.mxu0 0.0
      %1158 = vmatprep.subr.mxu0 0.0
      %1159 = vmatpush2.msra.mxu0 0.0
      %1160 = vmatprep.subr.mxu0 0.0
      %1161 = vmatpush2.msra.mxu0 0.0
      %1162 = vmatprep.subr.mxu0 0.0
      %1163 = vmatpush2.msra.mxu0 0.0
      %1164 = vmatprep.subr.mxu0 0.0
      %1165 = vmatpush2.msra.mxu0 0.0
      %1166 = vmatprep.subr.mxu0 0.0
      %1167 = vmatpush2.msra.mxu0 0.0
      %1168 = vmatprep.mubr.f32.mxu0 0.0
      %1169 = vmatmul.mubr.f32.gmra.mxu0 %v1099
      %v1170 = vpop.f32.mrf.mxu0
      %v1171 = vadd.f32 0.0, %v1170
      %v1172 = vpop.f32.mrf.mxu0
      %1173 = vmatprep.mubr.f32.mxu0 0.0
      %1174 = vmatmul.mubr.f32.gmra.mxu0 %v1102
      %v1175 = vpop.f32.mrf.mxu0
      %v1176 = vadd.f32 0.0, %v1175
      %v1177 = vpop.f32.mrf.mxu0
      %1178 = vdwg.mxu0
      %v1179 = vadd.f32 %v1078, %v1171
      %v1180 = vadd.f32 %v1083, %v1176
      %v1181 = vmax.f32 %v1179, 0.0
      %v1182 = vmax.f32 %v1180, 0.0
      %1185 = vrot.lane.b32.xlu0 %v1181, 4
      %v1186 = vpop.permute.xlu0 %1185
      %1187 = vrot.lane.b32.xlu0 %v1182, 4
      %v1188 = vpop.permute.xlu0 %1187
      %1191 = vst.msk [vmem:[#allocation2 + $0x1] sm:$0xff] %vm314, %v1186
      %1192 = vst.msk [vmem:[#allocation2 + $0x9] sm:$0xff] %vm314, %v1188
      %v1193 = vld [vmem:[#allocation2] sm:$0xff]
      %v1194 = vld [vmem:[#allocation2 + $0x8] sm:$0xff]
      %v1195 = vld [vmem:[%s6] sm:$0xff]
      %v1196 = vld [vmem:[%s6 + $0x8] sm:$0xff]
      %v1197 = vld [vmem:[%s6 + $0x10] sm:$0xff]
      %v1198 = vld [vmem:[%s6 + $0x18] sm:$0xff]
      %v1199 = vld [vmem:[%s6 + $0x20] sm:$0xff]
      %v1200 = vld [vmem:[%s6 + $0x28] sm:$0xff]
      %v1201 = vld [vmem:[%s6 + $0x30] sm:$0xff]
      %v1202 = vld [vmem:[%s6 + $0x38] sm:$0xff]
      %v1203 = vld [vmem:[%s6 + $0x40] sm:$0xff]
      %v1204 = vld [vmem:[#allocation2 + $0x1] sm:$0xff]
      %v1205 = vld [vmem:[#allocation2 + $0x9] sm:$0xff]
      %s1206 = scalar_lea.vmem %s6, 72
      %v1207 = vld [vmem:[%s1206] sm:$0xff]
      %v1208 = vld [vmem:[%s1206 + $0x8] sm:$0xff]
      %v1209 = vld [vmem:[%s1206 + $0x10] sm:$0xff]
      %v1210 = vld [vmem:[%s1206 + $0x18] sm:$0xff]
      %v1211 = vld [vmem:[%s1206 + $0x20] sm:$0xff]
      %v1212 = vld [vmem:[%s1206 + $0x28] sm:$0xff]
      %v1213 = vld [vmem:[%s1206 + $0x30] sm:$0xff]
      %v1214 = vld [vmem:[%s1206 + $0x38] sm:$0xff]
      %v1215 = vld [vmem:[%s1206 + $0x40] sm:$0xff]
      %v1217 = vsel %vm301, %v1204, 0
      %v1220 = vsel %vm301, %v1205, 0
      %1222 = vmatprep.subr.mxu0 0.0
      %1223 = vmatpush1.msra.mxu0 0.0
      %1224 = vmatprep.subr.mxu0 0.0
      %1225 = vmatpush1.msra.mxu0 0.0
      %1226 = vmatprep.subr.mxu0 0.0
      %1227 = vmatpush1.msra.mxu0 0.0
      %1228 = vmatprep.subr.mxu0 0.0
      %1229 = vmatpush1.msra.mxu0 0.0
      %1230 = vmatprep.subr.mxu0 0.0
      %1231 = vmatpush1.msra.mxu0 0.0
      %1232 = vmatprep.subr.mxu0 0.0
      %1233 = vmatpush1.msra.mxu0 0.0
      %1234 = vmatprep.subr.mxu0 0.0
      %1235 = vmatpush1.msra.mxu0 0.0
      %1236 = vmatprep.subr.mxu0 0.0
      %1237 = vmatpush1.msra.mxu0 %v1215
      %1238 = vmatprep.subr.mxu0 0.0
      %1239 = vmatpush1.msra.mxu0 %v1214
      %1240 = vmatprep.subr.mxu0 0.0
      %1241 = vmatpush1.msra.mxu0 %v1213
      %1242 = vmatprep.subr.mxu0 0.0
      %1243 = vmatpush1.msra.mxu0 %v1212
      %1244 = vmatprep.subr.mxu0 0.0
      %1245 = vmatpush1.msra.mxu0 %v1211
      %1246 = vmatprep.subr.mxu0 0.0
      %1247 = vmatpush1.msra.mxu0 %v1210
      %1248 = vmatprep.subr.mxu0 0.0
      %1249 = vmatpush1.msra.mxu0 %v1209
      %1250 = vmatprep.subr.mxu0 0.0
      %1251 = vmatpush1.msra.mxu0 %v1208
      %1252 = vmatprep.subr.mxu0 0.0
      %1253 = vmatpush1.msra.mxu0 %v1207
      %1254 = vmatprep.subr.mxu0 0.0
      %1255 = vmatpush2.msra.mxu0 0.0
      %1256 = vmatprep.subr.mxu0 0.0
      %1257 = vmatpush2.msra.mxu0 0.0
      %1258 = vmatprep.subr.mxu0 0.0
      %1259 = vmatpush2.msra.mxu0 0.0
      %1260 = vmatprep.subr.mxu0 0.0
      %1261 = vmatpush2.msra.mxu0 0.0
      %1262 = vmatprep.subr.mxu0 0.0
      %1263 = vmatpush2.msra.mxu0 0.0
      %1264 = vmatprep.subr.mxu0 0.0
      %1265 = vmatpush2.msra.mxu0 0.0
      %1266 = vmatprep.subr.mxu0 0.0
      %1267 = vmatpush2.msra.mxu0 0.0
      %1268 = vmatprep.subr.mxu0 0.0
      %1269 = vmatpush2.msra.mxu0 0.0
      %1270 = vmatprep.subr.mxu0 0.0
      %1271 = vmatpush2.msra.mxu0 0.0
      %1272 = vmatprep.subr.mxu0 0.0
      %1273 = vmatpush2.msra.mxu0 0.0
      %1274 = vmatprep.subr.mxu0 0.0
      %1275 = vmatpush2.msra.mxu0 0.0
      %1276 = vmatprep.subr.mxu0 0.0
      %1277 = vmatpush2.msra.mxu0 0.0
      %1278 = vmatprep.subr.mxu0 0.0
      %1279 = vmatpush2.msra.mxu0 0.0
      %1280 = vmatprep.subr.mxu0 0.0
      %1281 = vmatpush2.msra.mxu0 0.0
      %1282 = vmatprep.subr.mxu0 0.0
      %1283 = vmatpush2.msra.mxu0 0.0
      %1284 = vmatprep.subr.mxu0 0.0
      %1285 = vmatpush2.msra.mxu0 0.0
      %1286 = vmatprep.mubr.f32.mxu0 0.0
      %1287 = vmatmul.mubr.f32.gmra.mxu0 %v1217
      %v1288 = vpop.f32.mrf.mxu0
      %v1289 = vadd.f32 0.0, %v1288
      %v1290 = vpop.f32.mrf.mxu0
      %1291 = vmatprep.mubr.f32.mxu0 0.0
      %1292 = vmatmul.mubr.f32.gmra.mxu0 %v1220
      %v1293 = vpop.f32.mrf.mxu0
      %v1294 = vadd.f32 0.0, %v1293
      %v1295 = vpop.f32.mrf.mxu0
      %1296 = vdwg.mxu0
      %v1298 = vsel %vm301, %v1193, 0
      %v1301 = vsel %vm301, %v1194, 0
      %1303 = vmatprep.subr.mxu0 0.0
      %1304 = vmatpush1.msra.mxu0 0.0
      %1305 = vmatprep.subr.mxu0 0.0
      %1306 = vmatpush1.msra.mxu0 0.0
      %1307 = vmatprep.subr.mxu0 0.0
      %1308 = vmatpush1.msra.mxu0 0.0
      %1309 = vmatprep.subr.mxu0 0.0
      %1310 = vmatpush1.msra.mxu0 0.0
      %1311 = vmatprep.subr.mxu0 0.0
      %1312 = vmatpush1.msra.mxu0 0.0
      %1313 = vmatprep.subr.mxu0 0.0
      %1314 = vmatpush1.msra.mxu0 0.0
      %1315 = vmatprep.subr.mxu0 0.0
      %1316 = vmatpush1.msra.mxu0 0.0
      %1317 = vmatprep.subr.mxu0 0.0
      %1318 = vmatpush1.msra.mxu0 %v1203
      %1319 = vmatprep.subr.mxu0 0.0
      %1320 = vmatpush1.msra.mxu0 %v1202
      %1321 = vmatprep.subr.mxu0 0.0
      %1322 = vmatpush1.msra.mxu0 %v1201
      %1323 = vmatprep.subr.mxu0 0.0
      %1324 = vmatpush1.msra.mxu0 %v1200
      %1325 = vmatprep.subr.mxu0 0.0
      %1326 = vmatpush1.msra.mxu0 %v1199
      %1327 = vmatprep.subr.mxu0 0.0
      %1328 = vmatpush1.msra.mxu0 %v1198
      %1329 = vmatprep.subr.mxu0 0.0
      %1330 = vmatpush1.msra.mxu0 %v1197
      %1331 = vmatprep.subr.mxu0 0.0
      %1332 = vmatpush1.msra.mxu0 %v1196
      %1333 = vmatprep.subr.mxu0 0.0
      %1334 = vmatpush1.msra.mxu0 %v1195
      %1335 = vmatprep.subr.mxu0 0.0
      %1336 = vmatpush2.msra.mxu0 0.0
      %1337 = vmatprep.subr.mxu0 0.0
      %1338 = vmatpush2.msra.mxu0 0.0
      %1339 = vmatprep.subr.mxu0 0.0
      %1340 = vmatpush2.msra.mxu0 0.0
      %1341 = vmatprep.subr.mxu0 0.0
      %1342 = vmatpush2.msra.mxu0 0.0
      %1343 = vmatprep.subr.mxu0 0.0
      %1344 = vmatpush2.msra.mxu0 0.0
      %1345 = vmatprep.subr.mxu0 0.0
      %1346 = vmatpush2.msra.mxu0 0.0
      %1347 = vmatprep.subr.mxu0 0.0
      %1348 = vmatpush2.msra.mxu0 0.0
      %1349 = vmatprep.subr.mxu0 0.0
      %1350 = vmatpush2.msra.mxu0 0.0
      %1351 = vmatprep.subr.mxu0 0.0
      %1352 = vmatpush2.msra.mxu0 0.0
      %1353 = vmatprep.subr.mxu0 0.0
      %1354 = vmatpush2.msra.mxu0 0.0
      %1355 = vmatprep.subr.mxu0 0.0
      %1356 = vmatpush2.msra.mxu0 0.0
      %1357 = vmatprep.subr.mxu0 0.0
      %1358 = vmatpush2.msra.mxu0 0.0
      %1359 = vmatprep.subr.mxu0 0.0
      %1360 = vmatpush2.msra.mxu0 0.0
      %1361 = vmatprep.subr.mxu0 0.0
      %1362 = vmatpush2.msra.mxu0 0.0
      %1363 = vmatprep.subr.mxu0 0.0
      %1364 = vmatpush2.msra.mxu0 0.0
      %1365 = vmatprep.subr.mxu0 0.0
      %1366 = vmatpush2.msra.mxu0 0.0
      %1367 = vmatprep.mubr.f32.mxu0 0.0
      %1368 = vmatmul.mubr.f32.gmra.mxu0 %v1298
      %v1369 = vpop.f32.mrf.mxu0
      %v1370 = vadd.f32 %v1289, %v1369
      %v1371 = vpop.f32.mrf.mxu0
      %1372 = vmatprep.mubr.f32.mxu0 0.0
      %1373 = vmatmul.mubr.f32.gmra.mxu0 %v1301
      %v1374 = vpop.f32.mrf.mxu0
      %v1375 = vadd.f32 %v1294, %v1374
      %v1376 = vpop.f32.mrf.mxu0
      %1377 = vdwg.mxu0
      %v1378 = vld [vmem:[#allocation2 + $0x2] sm:$0xff]
      %v1379 = vld [vmem:[#allocation2 + $0xa] sm:$0xff]
      %s1380 = scalar_lea.vmem %s6, 144
      %v1381 = vld [vmem:[%s1380] sm:$0xff]
      %v1382 = vld [vmem:[%s1380 + $0x8] sm:$0xff]
      %v1383 = vld [vmem:[%s1380 + $0x10] sm:$0xff]
      %v1384 = vld [vmem:[%s1380 + $0x18] sm:$0xff]
      %v1385 = vld [vmem:[%s1380 + $0x20] sm:$0xff]
      %v1386 = vld [vmem:[%s1380 + $0x28] sm:$0xff]
      %v1387 = vld [vmem:[%s1380 + $0x30] sm:$0xff]
      %v1388 = vld [vmem:[%s1380 + $0x38] sm:$0xff]
      %v1389 = vld [vmem:[%s1380 + $0x40] sm:$0xff]
      %v1391 = vsel %vm301, %v1378, 0
      %v1394 = vsel %vm301, %v1379, 0
      %1396 = vmatprep.subr.mxu0 0.0
      %1397 = vmatpush1.msra.mxu0 0.0
      %1398 = vmatprep.subr.mxu0 0.0
      %1399 = vmatpush1.msra.mxu0 0.0
      %1400 = vmatprep.subr.mxu0 0.0
      %1401 = vmatpush1.msra.mxu0 0.0
      %1402 = vmatprep.subr.mxu0 0.0
      %1403 = vmatpush1.msra.mxu0 0.0
      %1404 = vmatprep.subr.mxu0 0.0
      %1405 = vmatpush1.msra.mxu0 0.0
      %1406 = vmatprep.subr.mxu0 0.0
      %1407 = vmatpush1.msra.mxu0 0.0
      %1408 = vmatprep.subr.mxu0 0.0
      %1409 = vmatpush1.msra.mxu0 0.0
      %1410 = vmatprep.subr.mxu0 0.0
      %1411 = vmatpush1.msra.mxu0 %v1389
      %1412 = vmatprep.subr.mxu0 0.0
      %1413 = vmatpush1.msra.mxu0 %v1388
      %1414 = vmatprep.subr.mxu0 0.0
      %1415 = vmatpush1.msra.mxu0 %v1387
      %1416 = vmatprep.subr.mxu0 0.0
      %1417 = vmatpush1.msra.mxu0 %v1386
      %1418 = vmatprep.subr.mxu0 0.0
      %1419 = vmatpush1.msra.mxu0 %v1385
      %1420 = vmatprep.subr.mxu0 0.0
      %1421 = vmatpush1.msra.mxu0 %v1384
      %1422 = vmatprep.subr.mxu0 0.0
      %1423 = vmatpush1.msra.mxu0 %v1383
      %1424 = vmatprep.subr.mxu0 0.0
      %1425 = vmatpush1.msra.mxu0 %v1382
      %1426 = vmatprep.subr.mxu0 0.0
      %1427 = vmatpush1.msra.mxu0 %v1381
      %1428 = vmatprep.subr.mxu0 0.0
      %1429 = vmatpush2.msra.mxu0 0.0
      %1430 = vmatprep.subr.mxu0 0.0
      %1431 = vmatpush2.msra.mxu0 0.0
      %1432 = vmatprep.subr.mxu0 0.0
      %1433 = vmatpush2.msra.mxu0 0.0
      %1434 = vmatprep.subr.mxu0 0.0
      %1435 = vmatpush2.msra.mxu0 0.0
      %1436 = vmatprep.subr.mxu0 0.0
      %1437 = vmatpush2.msra.mxu0 0.0
      %1438 = vmatprep.subr.mxu0 0.0
      %1439 = vmatpush2.msra.mxu0 0.0
      %1440 = vmatprep.subr.mxu0 0.0
      %1441 = vmatpush2.msra.mxu0 0.0
      %1442 = vmatprep.subr.mxu0 0.0
      %1443 = vmatpush2.msra.mxu0 0.0
      %1444 = vmatprep.subr.mxu0 0.0
      %1445 = vmatpush2.msra.mxu0 0.0
      %1446 = vmatprep.subr.mxu0 0.0
      %1447 = vmatpush2.msra.mxu0 0.0
      %1448 = vmatprep.subr.mxu0 0.0
      %1449 = vmatpush2.msra.mxu0 0.0
      %1450 = vmatprep.subr.mxu0 0.0
      %1451 = vmatpush2.msra.mxu0 0.0
      %1452 = vmatprep.subr.mxu0 0.0
      %1453 = vmatpush2.msra.mxu0 0.0
      %1454 = vmatprep.subr.mxu0 0.0
      %1455 = vmatpush2.msra.mxu0 0.0
      %1456 = vmatprep.subr.mxu0 0.0
      %1457 = vmatpush2.msra.mxu0 0.0
      %1458 = vmatprep.subr.mxu0 0.0
      %1459 = vmatpush2.msra.mxu0 0.0
      %1460 = vmatprep.mubr.f32.mxu0 0.0
      %1461 = vmatmul.mubr.f32.gmra.mxu0 %v1391
      %v1462 = vpop.f32.mrf.mxu0
      %v1463 = vadd.f32 0.0, %v1462
      %v1464 = vpop.f32.mrf.mxu0
      %1465 = vmatprep.mubr.f32.mxu0 0.0
      %1466 = vmatmul.mubr.f32.gmra.mxu0 %v1394
      %v1467 = vpop.f32.mrf.mxu0
      %v1468 = vadd.f32 0.0, %v1467
      %v1469 = vpop.f32.mrf.mxu0
      %1470 = vdwg.mxu0
      %v1471 = vadd.f32 %v1370, %v1463
      %v1472 = vadd.f32 %v1375, %v1468
      %v1473 = vmax.f32 %v1471, 0.0
      %v1474 = vmax.f32 %v1472, 0.0
      %1475 = vst [vmem:[%s278] sm:$0xff] %v1473
      %1476 = vst [vmem:[%s278 + $0x8] sm:$0xff] %v1474
      %p1477 = scmp.lt.s32.totalorder %s18, 1
      %s1478 = scalar_select %p1477, %s18, 1
      %s1479 = smul.addr %s1478, 2
      %s1480 = smul.addr %s1479, 8
      %s1481 = scalar_lea.vmem %s7, %s1480
      // Predicated region
      $region49: #{conv_block2d_forward.1} parent=47 // pred_check
        %p1482 = pneg %p188
      $region50: #{conv_block2d_forward.1} parent=47 // pred_check_branch
        %1484 = sbr.rel (%p1482) target = $region52
      $region51: #{conv_block2d_forward.1} parent=47 // pred_region
        _
      $region52: #{conv_block2d_forward.1} parent=47 // pred_fallthru
        _
    $region48: #{conv_block2d_forward.1} parent=5 // pred_fallthru
      _
    %p1485 = scmp.le.s32.totalorder 2, %s13
    // Predicated region
    $region53: #{conv_block2d_forward.1} parent=5 // pred_check
      %p1486 = pneg %p1485
    $region54: #{conv_block2d_forward.1} parent=5 // pred_check_branch
      %1488 = sbr.rel (%p1486) target = $region56
    $region55: #{conv_block2d_forward.1} parent=5 // pred_region
      %s1489 = ssub.s32 %s13, 2
      // Predicated region
      $region57: #{conv_block2d_forward.1} parent=55 // pred_check
        %p1490 = pneg %p194
      $region58: #{conv_block2d_forward.1} parent=55 // pred_check_branch
        %1492 = sbr.rel (%p1490) target = $region60
      $region59: #{conv_block2d_forward.1} parent=55 // pred_region
        %p1493 = scmp.lt.s32.totalorder %s19, 1
        %s1494 = scalar_select %p1493, %s19, 1
        %s1495 = smul.addr %s1494, 2
        %s1496 = smul.addr %s1495, 8
        %s1497 = scalar_lea.vmem %s7, %s1496
      $region60: #{conv_block2d_forward.1} parent=55 // pred_fallthru
        _
    $region56: #{conv_block2d_forward.1} parent=5 // pred_fallthru
      _
  $region6: #{conv_block2d_forward.1} parent=0 // loop_footer
    %s17 = sadd.s32 1, %s13
  $region7: #{conv_block2d_forward.1} parent=0 // loop_footer_branch
    %12 = sbr.rel target = $region3
  $region8: #{conv_block2d_forward.1} parent=0 // loop_exit
    _

</llo_original>
